<compile_context>
chip_gen: v6e
topology: v6e:2x2x1
jax: 0.10.0
libtpu: 0.0.40
codegen_flags: <defaults>
</compile_context>

<pallas_src>
import functools

import jax
import jax.numpy as jnp
from jax.experimental import pallas as pl
from jax.experimental.pallas import tpu as pltpu


OUT_LANES = 128  # lane-dense packed output width: [anomaly | financial | legal | conf | pad]


# ----------------------------- Pallas kernel ------------------------------ #
def transparency_kernel(
    ids_ref,                 # VMEM (B_TILE, 1, S_TILE) int32
    mask_ref,                # VMEM (B_TILE, 1, S_TILE) f32
    emb_ref,                 # VMEM (V, H) bf16   (whole table, constant index_map)
    wp_ref, bp_ref,          # pooler: (H, H) bf16, (1, H) f32
    w1_ref, b1_ref,          # fused head layer 1: (H, HC) bf16, (1, HC) f32
    w2_ref, b2_ref,          # fused head layer 2: (HC, 128) bf16, (1, 128) f32
    out_ref,                 # VMEM (B_TILE, 128) f32   [packed logits]
    acc_ref,                 # VMEM (B_TILE, H) f32 scratch (masked-sum accumulator)
    msum_ref,                # VMEM (B_TILE, 1) f32 scratch (mask-count accumulator)
    *,
    conf_lane,               # static: lane index of the confidence output
):
    b_tile = mask_ref.shape[0]
    s_tile = mask_ref.shape[2]
    vocab = emb_ref.shape[0]
    s_idx = pl.program_id(1)
    n_s = pl.num_programs(1)

    # --- init accumulators at the start of the sequence reduction ---------
    @pl.when(s_idx == 0)
    def _init():
        acc_ref[...] = jnp.zeros_like(acc_ref)
        msum_ref[...] = jnp.zeros_like(msum_ref)

    # --- fused gather + masked sum for this sequence tile ------------------
    # hist[b, v] = sum_s mask[b, s] * (ids[b, s] == v)          (VPU + lane reduce)
    # acc[b, :] += hist @ emb_table                             (one MXU dot)
    # Padded tokens / padded batch rows carry mask == 0 and contribute nothing,
    # so no per-row length guards are needed.
    ids = ids_ref[...]                                   # (b, 1, s) int32
    mask3 = mask_ref[...]                                # (b, 1, s) f32
    v_iota = jax.lax.broadcasted_iota(jnp.int32, (b_tile, vocab, s_tile), 1)
    w_onehot = jnp.where(ids == v_iota, mask3, 0.0)      # (b, V, s) f32
    hist = jnp.sum(w_onehot, axis=2)                     # (b, V) f32 (lane reduce)
    acc_ref[...] += jnp.dot(hist.astype(emb_ref.dtype), emb_ref[...],
                            preferred_element_type=jnp.float32)
    msum_ref[...] += jnp.sum(mask3, axis=2)              # (b, 1)

    # --- finalize: pooler + fused heads, packed lane-dense output ----------
    @pl.when(s_idx == n_s - 1)
    def _finalize():
        denom = jnp.maximum(msum_ref[...], 1.0)          # (b, 1)
        mean = acc_ref[...] / denom                      # exact divide (once per tile)

        # BERT-style pooler: dense + tanh (f32 accumulate, f32 elementwise)
        pooled = jnp.tanh(
            jnp.dot(mean.astype(wp_ref.dtype), wp_ref[...],
                    preferred_element_type=jnp.float32) + bp_ref[...])

        # Fused four-head MLP: one (H,HC) dot + ReLU, one (HC,128) dot.
        h = jnp.dot(pooled.astype(w1_ref.dtype), w1_ref[...],
                    preferred_element_type=jnp.float32) + b1_ref[...]
        h = jnp.maximum(h, 0.0)
        z = jnp.dot(h.astype(w2_ref.dtype), w2_ref[...],
                    preferred_element_type=jnp.float32) + b2_ref[...]  # (b, 128)

        # Sigmoid only on the confidence lane; unmasked 128-lane store.
        lane = jax.lax.broadcasted_iota(jnp.int32, z.shape, 1)
        out_ref[...] = jnp.where(lane == conf_lane, jax.nn.sigmoid(z), z)


# --------------------------- parameter packing ----------------------------- #
def pack_params(params):
    """Fuse per-head weights into [W1cat, block-diag W2] and cast to bf16."""
    h2 = params["aw1"].shape[1]
    h4 = params["lw1"].shape[1]
    nl = params["aw2"].shape[1]
    hc = 2 * h2 + 2 * h4
    assert nl + 5 + 2 + 1 <= OUT_LANES

    w1 = jnp.concatenate(
        [params["aw1"], params["fw1"], params["lw1"], params["cw1"]], axis=1)
    b1 = jnp.concatenate(
        [params["ab1"], params["fb1"], params["lb1"], params["cb1"]], axis=1)

    w2 = jnp.zeros((hc, OUT_LANES), jnp.float32)
    b2 = jnp.zeros((1, OUT_LANES), jnp.float32)
    row = 0
    col = 0
    for wk, bk, width, rows in (("aw2", "ab2", nl, h2),
                                ("fw2", "fb2", 5, h2),
                                ("lw2", "lb2", 2, h4),
                                ("cw2", "cb2", 1, h4)):
        w2 = w2.at[row:row + rows, col:col + width].set(params[wk])
        b2 = b2.at[:, col:col + width].set(params[bk])
        row += rows
        col += width

    return {
        "embedding": params["embedding"].astype(jnp.bfloat16),
        "wp": params["wp"].astype(jnp.bfloat16),
        "bp": params["bp"].astype(jnp.float32),
        "w1": w1.astype(jnp.bfloat16),
        "b1": b1.astype(jnp.float32),
        "w2": w2.astype(jnp.bfloat16),
        "b2": b2.astype(jnp.float32),
        "head_dims": (nl, 5, 2, 1),
    }


# ------------------------------ wrapper ------------------------------------ #
def transparency_classifier_forward(input_ids, attention_mask, packed):
    """Returns dict: anomaly_logits (B,nl), financial_logits (B,5),
    legal_logits (B,2), confidence (B,1)."""
    B, S = input_ids.shape
    V, H = packed["embedding"].shape
    HC = packed["w1"].shape[1]
    nl, nf, ng, _ = packed["head_dims"]
    conf_lane = nl + nf + ng

    # Batch tile: big for production batches (MXU row utilization), and >=2
    # tiles when possible so the "parallel" grid axis shards across both v7x
    # TensorCores; 8 sublanes only for tiny/debug batches.
    if B >= 256:
        B_TILE = 128
    elif B >= 128:
        B_TILE = 64
    else:
        B_TILE = 8
    B_pad = ((B + B_TILE - 1) // B_TILE) * B_TILE

    # Sequence tile: whole sequence if it fits one lane-legal block, otherwise
    # 128-lane tiles with zero-mask padding (no divisibility requirement on S).
    if S <= 128:
        S_TILE = S
        S_pad = S
    else:
        S_TILE = 128
        S_pad = ((S + 127) // 128) * 128

    ids = jnp.zeros((B_pad, 1, S_pad), jnp.int32)
    ids = ids.at[:B, 0, :S].set(input_ids.astype(jnp.int32))
    mask = jnp.zeros((B_pad, 1, S_pad), jnp.float32)
    mask = mask.at[:B, 0, :S].set(attention_mask.astype(jnp.float32))

    grid = (B_pad // B_TILE, S_pad // S_TILE)
    kernel = functools.partial(transparency_kernel, conf_lane=conf_lane)

    # VMEM budget note: the embedding table + weights are VMEM-resident
    # (constant index_maps).  At production BERT scale raise vmem_limit_bytes
    # to ~96 MiB on v5e/v6e (128 MiB physical); on v7x (64 MiB physical) keep
    # the table in HBM instead (see kernel TODO) and stay <= ~56 MiB.
    out = pl.pallas_call(
        kernel,
        out_shape=jax.ShapeDtypeStruct((B_pad, OUT_LANES), jnp.float32),
        grid_spec=pltpu.PrefetchScalarGridSpec(
            num_scalar_prefetch=0,
            grid=grid,
            in_specs=[
                pl.BlockSpec((B_TILE, 1, S_TILE), lambda b, s: (b, 0, s)),  # ids
                pl.BlockSpec((B_TILE, 1, S_TILE), lambda b, s: (b, 0, s)),  # mask
                pl.BlockSpec((V, H), lambda b, s: (0, 0)),                  # emb table (VMEM resident)
                pl.BlockSpec((H, H), lambda b, s: (0, 0)),                  # wp
                pl.BlockSpec((1, H), lambda b, s: (0, 0)),                  # bp
                pl.BlockSpec((H, HC), lambda b, s: (0, 0)),                 # w1 (fused)
                pl.BlockSpec((1, HC), lambda b, s: (0, 0)),                 # b1 (fused)
                pl.BlockSpec((HC, OUT_LANES), lambda b, s: (0, 0)),         # w2 (block-diag)
                pl.BlockSpec((1, OUT_LANES), lambda b, s: (0, 0)),          # b2 (packed)
            ],
            out_specs=pl.BlockSpec((B_TILE, OUT_LANES), lambda b, s: (b, 0)),
            scratch_shapes=[
                pltpu.VMEM((B_TILE, H), jnp.float32),   # masked-sum accumulator
                pltpu.VMEM((B_TILE, 1), jnp.float32),   # mask-count accumulator
            ],
        ),
        compiler_params=pltpu.CompilerParams(
            dimension_semantics=("parallel", "arbitrary"),
            vmem_limit_bytes=32 * 1024 * 1024,
        ),
    )(ids, mask, packed["embedding"], packed["wp"], packed["bp"],
      packed["w1"], packed["b1"], packed["w2"], packed["b2"])

    return {
        "anomaly_logits": out[:B, 0:nl],
        "financial_logits": out[:B, nl:nl + nf],
        "legal_logits": out[:B, nl + nf:nl + nf + ng],
        "confidence": out[:B, conf_lane:conf_lane + 1],
    }


# ------------------------- deterministic params ---------------------------- #
def init_params(key, vocab_size, hidden_size, num_labels):
    h = hidden_size
    h2, h4 = h // 2, h // 4
    keys = jax.random.split(key, 20)
    k = iter(keys)

    def w(kk, shape):
        return jax.random.normal(kk, shape, dtype=jnp.float32) * 0.02

    params = {
        "embedding": w(next(k), (vocab_size, h)),
        # pooler
        "wp": w(next(k), (h, h)),
        "bp": jnp.zeros((1, h), jnp.float32),
        # anomaly head: h -> h/2 -> num_labels
        "aw1": w(next(k), (h, h2)), "ab1": jnp.zeros((1, h2), jnp.float32),
        "aw2": w(next(k), (h2, num_labels)), "ab2": jnp.zeros((1, num_labels), jnp.float32),
        # financial head: h -> h/2 -> 5
        "fw1": w(next(k), (h, h2)), "fb1": jnp.zeros((1, h2), jnp.float32),
        "fw2": w(next(k), (h2, 5)), "fb2": jnp.zeros((1, 5), jnp.float32),
        # legal head: h -> h/4 -> 2
        "lw1": w(next(k), (h, h4)), "lb1": jnp.zeros((1, h4), jnp.float32),
        "lw2": w(next(k), (h4, 2)), "lb2": jnp.zeros((1, 2), jnp.float32),
        # confidence head: h -> h/4 -> 1 (sigmoid)
        "cw1": w(next(k), (h, h4)), "cb1": jnp.zeros((1, h4), jnp.float32),
        "cw2": w(next(k), (h4, 1)), "cb2": jnp.zeros((1, 1), jnp.float32),
    }
    return params


# --------------------------------- main ------------------------------------ #
if __name__ == "__main__":
    B, S, H = 2, 8, 32
    VOCAB = 100
    NUM_LABELS = 3

    key = jax.random.PRNGKey(0)
    pkey, ikey = jax.random.split(key)

    params = init_params(pkey, VOCAB, H, NUM_LABELS)
    packed = pack_params(params)

    input_ids = jax.random.randint(ikey, (B, S), 0, VOCAB, dtype=jnp.int32)
    attention_mask = jnp.ones((B, S), dtype=jnp.int32).at[1, 6:].set(0)  # ragged mask

    outputs = transparency_classifier_forward(input_ids, attention_mask, packed)
    jax.block_until_ready(outputs)

    assert outputs["anomaly_logits"].shape == (B, NUM_LABELS)
    assert outputs["financial_logits"].shape == (B, 5)
    assert outputs["legal_logits"].shape == (B, 2)
    assert outputs["confidence"].shape == (B, 1)
    assert bool(jnp.all(outputs["confidence"] >= 0.0)) and bool(
        jnp.all(outputs["confidence"] <= 1.0)
    )
    assert bool(jnp.all(jnp.isfinite(outputs["anomaly_logits"])))
    assert bool(jnp.all(jnp.isfinite(outputs["financial_logits"])))
    assert bool(jnp.all(jnp.isfinite(outputs["legal_logits"])))

    print("KERNEL_OK")
</pallas_src>

<mosaic_0001>
module attributes {stable_mosaic.version = 11 : i64} {
  func.func @transparency_kernel(%arg0: i32, %arg1: i32, %arg2: memref<8x1x8xi32, #tpu.memory_space<vmem>>, %arg3: memref<8x1x8xf32, #tpu.memory_space<vmem>>, %arg4: memref<100x32xbf16, #tpu.memory_space<vmem>>, %arg5: memref<32x32xbf16, #tpu.memory_space<vmem>>, %arg6: memref<1x32xf32, #tpu.memory_space<vmem>>, %arg7: memref<32x48xbf16, #tpu.memory_space<vmem>>, %arg8: memref<1x48xf32, #tpu.memory_space<vmem>>, %arg9: memref<48x128xbf16, #tpu.memory_space<vmem>>, %arg10: memref<1x128xf32, #tpu.memory_space<vmem>>, %arg11: memref<8x128xf32, #tpu.memory_space<vmem>>, %arg12: memref<8x32xf32, #tpu.memory_space<vmem>>, %arg13: memref<8x1xf32, #tpu.memory_space<vmem>>) attributes {dimension_semantics = [#tpu.dimension_semantics<parallel>, #tpu.dimension_semantics<arbitrary>], iteration_bounds = array<i64: 1, 1>, scalar_prefetch = 0 : i64, scratch_operands = 2 : i64, tpu.core_type = #tpu.core_type<tc>, window_params = [{transform_indices = @transform_0, window_bounds = array<i64: 8, 1, 8>}, {transform_indices = @transform_1, window_bounds = array<i64: 8, 1, 8>}, {pipeline_mode = #tpu.pipeline_mode<synchronous>, transform_indices = @transform_2, window_bounds = array<i64: 100, 32>}, {pipeline_mode = #tpu.pipeline_mode<synchronous>, transform_indices = @transform_3, window_bounds = array<i64: 32, 32>}, {pipeline_mode = #tpu.pipeline_mode<synchronous>, transform_indices = @transform_4, window_bounds = array<i64: 1, 32>}, {pipeline_mode = #tpu.pipeline_mode<synchronous>, transform_indices = @transform_5, window_bounds = array<i64: 32, 48>}, {pipeline_mode = #tpu.pipeline_mode<synchronous>, transform_indices = @transform_6, window_bounds = array<i64: 1, 48>}, {pipeline_mode = #tpu.pipeline_mode<synchronous>, transform_indices = @transform_7, window_bounds = array<i64: 48, 128>}, {pipeline_mode = #tpu.pipeline_mode<synchronous>, transform_indices = @transform_8, window_bounds = array<i64: 1, 128>}, {transform_indices = @transform_9, window_bounds = array<i64: 8, 128>}]} {
    %c0_i32 = arith.constant 0 : i32
    %0 = arith.cmpi eq, %arg1, %c0_i32 : i32
    %1 = arith.extui %0 : i1 to i32
    %c0_i32_0 = arith.constant 0 : i32
    %2 = arith.cmpi ne, %1, %c0_i32_0 : i32
    scf.if %2 {
      %cst_21 = arith.constant 0.000000e+00 : f32
      %26 = vector.broadcast %cst_21 : f32 to vector<8x32xf32>
      %c0_22 = arith.constant 0 : index
      %c0_23 = arith.constant 0 : index
      %27 = vector.load %arg12[%c0_22, %c0_23] : memref<8x32xf32, #tpu.memory_space<vmem>>, vector<8x32xf32>
      tpu.vector_store %arg12[%c0_22, %c0_23], %26 {strides = array<i32>} : memref<8x32xf32, #tpu.memory_space<vmem>>, vector<8x32xf32>,
      %cst_24 = arith.constant 0.000000e+00 : f32
      %28 = vector.broadcast %cst_24 : f32 to vector<8x1xf32>
      %c0_25 = arith.constant 0 : index
      %c0_26 = arith.constant 0 : index
      %29 = vector.load %arg13[%c0_25, %c0_26] : memref<8x1xf32, #tpu.memory_space<vmem>>, vector<8x1xf32>
      tpu.vector_store %arg13[%c0_25, %c0_26], %28 {strides = array<i32>} : memref<8x1xf32, #tpu.memory_space<vmem>>, vector<8x1xf32>,
    } else {
    }
    %c0 = arith.constant 0 : index
    %c0_1 = arith.constant 0 : index
    %c0_2 = arith.constant 0 : index
    %3 = vector.load %arg2[%c0, %c0_1, %c0_2] : memref<8x1x8xi32, #tpu.memory_space<vmem>>, vector<8x1x8xi32>
    %c0_3 = arith.constant 0 : index
    %c0_4 = arith.constant 0 : index
    %c0_5 = arith.constant 0 : index
    %4 = vector.load %arg3[%c0_3, %c0_4, %c0_5] : memref<8x1x8xf32, #tpu.memory_space<vmem>>, vector<8x1x8xf32>
    %5 = tpu.iota {dimensions = array<i32: 1>} : vector<8x100x8xi32>
    %6 = vector.broadcast %3 : vector<8x1x8xi32> to vector<8x100x8xi32>
    %7 = arith.cmpi eq, %6, %5 : vector<8x100x8xi32>
    %cst = arith.constant 0.000000e+00 : f32
    %8 = vector.shape_cast %4 : vector<8x1x8xf32> to vector<8x1x8xf32>
    %9 = vector.broadcast %8 : vector<8x1x8xf32> to vector<8x100x8xf32>
    %10 = vector.broadcast %cst : f32 to vector<8x100x8xf32>
    %11 = arith.select %7, %9, %10 : vector<8x100x8xi1>, vector<8x100x8xf32>
    %cst_6 = arith.constant dense<0.000000e+00> : vector<8x100xf32>
    %12 = vector.multi_reduction <add>, %11, %cst_6 [2] : vector<8x100x8xf32> to vector<8x100xf32>
    %c0_7 = arith.constant 0 : index
    %c0_8 = arith.constant 0 : index
    %13 = vector.load %arg12[%c0_7, %c0_8] : memref<8x32xf32, #tpu.memory_space<vmem>>, vector<8x32xf32>
    %14 = arith.truncf %12 : vector<8x100xf32> to vector<8x100xbf16>
    %c0_9 = arith.constant 0 : index
    %c0_10 = arith.constant 0 : index
    %15 = vector.load %arg4[%c0_9, %c0_10] : memref<100x32xbf16, #tpu.memory_space<vmem>>, vector<100x32xbf16>
    %cst_11 = arith.constant dense<0.000000e+00> : vector<8x32xf32>
    %16 = tpu.matmul %14, %15, %cst_11 {dimension_numbers = #tpu.dot_dimension_numbers<[1], [0], [0], [1], [0, 0, 1, 1], [], []>} : vector<8x100xbf16>, vector<100x32xbf16>, vector<8x32xf32> -> vector<8x32xf32>
    %17 = arith.addf %13, %16 : vector<8x32xf32>
    %c0_12 = arith.constant 0 : index
    %c0_13 = arith.constant 0 : index
    %18 = vector.load %arg12[%c0_12, %c0_13] : memref<8x32xf32, #tpu.memory_space<vmem>>, vector<8x32xf32>
    tpu.vector_store %arg12[%c0_12, %c0_13], %17 {strides = array<i32>} : memref<8x32xf32, #tpu.memory_space<vmem>>, vector<8x32xf32>,
    %c0_14 = arith.constant 0 : index
    %c0_15 = arith.constant 0 : index
    %19 = vector.load %arg13[%c0_14, %c0_15] : memref<8x1xf32, #tpu.memory_space<vmem>>, vector<8x1xf32>
    %cst_16 = arith.constant dense<0.000000e+00> : vector<8x1xf32>
    %20 = vector.multi_reduction <add>, %4, %cst_16 [2] : vector<8x1x8xf32> to vector<8x1xf32>
    %21 = arith.addf %19, %20 : vector<8x1xf32>
    %c0_17 = arith.constant 0 : index
    %c0_18 = arith.constant 0 : index
    %22 = vector.load %arg13[%c0_17, %c0_18] : memref<8x1xf32, #tpu.memory_space<vmem>>, vector<8x1xf32>
    tpu.vector_store %arg13[%c0_17, %c0_18], %21 {strides = array<i32>} : memref<8x1xf32, #tpu.memory_space<vmem>>, vector<8x1xf32>,
    %c0_i32_19 = arith.constant 0 : i32
    %23 = arith.cmpi eq, %arg1, %c0_i32_19 : i32
    %24 = arith.extui %23 : i1 to i32
    %c0_i32_20 = arith.constant 0 : i32
    %25 = arith.cmpi ne, %24, %c0_i32_20 : i32
    scf.if %25 {
      %c0_21 = arith.constant 0 : index
      %c0_22 = arith.constant 0 : index
      %26 = vector.load %arg13[%c0_21, %c0_22] : memref<8x1xf32, #tpu.memory_space<vmem>>, vector<8x1xf32>
      %cst_23 = arith.constant 1.000000e+00 : f32
      %27 = vector.broadcast %cst_23 : f32 to vector<8x1xf32>
      %28 = arith.maximumf %26, %27 : vector<8x1xf32>
      %c0_24 = arith.constant 0 : index
      %c0_25 = arith.constant 0 : index
      %29 = vector.load %arg12[%c0_24, %c0_25] : memref<8x32xf32, #tpu.memory_space<vmem>>, vector<8x32xf32>
      %30 = vector.broadcast %28 : vector<8x1xf32> to vector<8x32xf32>
      %31 = arith.divf %29, %30 : vector<8x32xf32>
      %32 = arith.truncf %31 : vector<8x32xf32> to vector<8x32xbf16>
      %c0_26 = arith.constant 0 : index
      %c0_27 = arith.constant 0 : index
      %33 = vector.load %arg5[%c0_26, %c0_27] : memref<32x32xbf16, #tpu.memory_space<vmem>>, vector<32x32xbf16>
      %cst_28 = arith.constant dense<0.000000e+00> : vector<8x32xf32>
      %34 = tpu.matmul %32, %33, %cst_28 {dimension_numbers = #tpu.dot_dimension_numbers<[1], [0], [0], [1], [0, 0, 1, 1], [], []>} : vector<8x32xbf16>, vector<32x32xbf16>, vector<8x32xf32> -> vector<8x32xf32>
      %c0_29 = arith.constant 0 : index
      %c0_30 = arith.constant 0 : index
      %35 = vector.load %arg6[%c0_29, %c0_30] : memref<1x32xf32, #tpu.memory_space<vmem>>, vector<1x32xf32>
      %36 = vector.broadcast %35 : vector<1x32xf32> to vector<8x32xf32>
      %37 = arith.addf %34, %36 : vector<8x32xf32>
      %38 = math.tanh %37 : vector<8x32xf32>
      %39 = arith.truncf %38 : vector<8x32xf32> to vector<8x32xbf16>
      %c0_31 = arith.constant 0 : index
      %c0_32 = arith.constant 0 : index
      %40 = vector.load %arg7[%c0_31, %c0_32] : memref<32x48xbf16, #tpu.memory_space<vmem>>, vector<32x48xbf16>
      %cst_33 = arith.constant dense<0.000000e+00> : vector<8x48xf32>
      %41 = tpu.matmul %39, %40, %cst_33 {dimension_numbers = #tpu.dot_dimension_numbers<[1], [0], [0], [1], [0, 0, 1, 1], [], []>} : vector<8x32xbf16>, vector<32x48xbf16>, vector<8x48xf32> -> vector<8x48xf32>
      %c0_34 = arith.constant 0 : index
      %c0_35 = arith.constant 0 : index
      %42 = vector.load %arg8[%c0_34, %c0_35] : memref<1x48xf32, #tpu.memory_space<vmem>>, vector<1x48xf32>
      %43 = vector.broadcast %42 : vector<1x48xf32> to vector<8x48xf32>
      %44 = arith.addf %41, %43 : vector<8x48xf32>
      %cst_36 = arith.constant 0.000000e+00 : f32
      %45 = vector.broadcast %cst_36 : f32 to vector<8x48xf32>
      %46 = arith.maximumf %44, %45 : vector<8x48xf32>
      %47 = arith.truncf %46 : vector<8x48xf32> to vector<8x48xbf16>
      %c0_37 = arith.constant 0 : index
      %c0_38 = arith.constant 0 : index
      %48 = vector.load %arg9[%c0_37, %c0_38] : memref<48x128xbf16, #tpu.memory_space<vmem>>, vector<48x128xbf16>
      %cst_39 = arith.constant dense<0.000000e+00> : vector<8x128xf32>
      %49 = tpu.matmul %47, %48, %cst_39 {dimension_numbers = #tpu.dot_dimension_numbers<[1], [0], [0], [1], [0, 0, 1, 1], [], []>} : vector<8x48xbf16>, vector<48x128xbf16>, vector<8x128xf32> -> vector<8x128xf32>
      %c0_40 = arith.constant 0 : index
      %c0_41 = arith.constant 0 : index
      %50 = vector.load %arg10[%c0_40, %c0_41] : memref<1x128xf32, #tpu.memory_space<vmem>>, vector<1x128xf32>
      %51 = vector.broadcast %50 : vector<1x128xf32> to vector<8x128xf32>
      %52 = arith.addf %49, %51 : vector<8x128xf32>
      %53 = tpu.iota {dimensions = array<i32: 1>} : vector<8x128xi32>
      %c10_i32 = arith.constant 10 : i32
      %54 = vector.broadcast %c10_i32 : i32 to vector<8x128xi32>
      %55 = arith.cmpi eq, %53, %54 : vector<8x128xi32>
      %56 = arith.negf %52 : vector<8x128xf32>
      %57 = math.exp %56 : vector<8x128xf32>
      %cst_42 = arith.constant 1.000000e+00 : f32
      %58 = vector.broadcast %cst_42 : f32 to vector<8x128xf32>
      %59 = arith.addf %58, %57 : vector<8x128xf32>
      %60 = arith.divf %58, %59 : vector<8x128xf32>
      %61 = arith.select %55, %60, %52 : vector<8x128xi1>, vector<8x128xf32>
      %c0_43 = arith.constant 0 : index
      %c0_44 = arith.constant 0 : index
      %62 = vector.load %arg11[%c0_43, %c0_44] : memref<8x128xf32, #tpu.memory_space<vmem>>, vector<8x128xf32>
      tpu.vector_store %arg11[%c0_43, %c0_44], %61 {strides = array<i32>} : memref<8x128xf32, #tpu.memory_space<vmem>>, vector<8x128xf32>,
    } else {
    }
    return
  }
  func.func @transform_0(%arg0: i32, %arg1: i32) -> (i32, i32, i32) {
    %c0_i32 = arith.constant 0 : i32
    %c0_i32_0 = arith.constant 0 : i32
    return %arg0, %c0_i32, %arg1 : i32, i32, i32
  }
  func.func @transform_1(%arg0: i32, %arg1: i32) -> (i32, i32, i32) {
    %c0_i32 = arith.constant 0 : i32
    %c0_i32_0 = arith.constant 0 : i32
    return %arg0, %c0_i32, %arg1 : i32, i32, i32
  }
  func.func @transform_2(%arg0: i32, %arg1: i32) -> (i32, i32) {
    %c0_i32 = arith.constant 0 : i32
    %c0_i32_0 = arith.constant 0 : i32
    %c0_i32_1 = arith.constant 0 : i32
    return %c0_i32, %c0_i32_0 : i32, i32
  }
  func.func @transform_3(%arg0: i32, %arg1: i32) -> (i32, i32) {
    %c0_i32 = arith.constant 0 : i32
    %c0_i32_0 = arith.constant 0 : i32
    %c0_i32_1 = arith.constant 0 : i32
    return %c0_i32, %c0_i32_0 : i32, i32
  }
  func.func @transform_4(%arg0: i32, %arg1: i32) -> (i32, i32) {
    %c0_i32 = arith.constant 0 : i32
    %c0_i32_0 = arith.constant 0 : i32
    %c0_i32_1 = arith.constant 0 : i32
    return %c0_i32, %c0_i32_0 : i32, i32
  }
  func.func @transform_5(%arg0: i32, %arg1: i32) -> (i32, i32) {
    %c0_i32 = arith.constant 0 : i32
    %c0_i32_0 = arith.constant 0 : i32
    %c0_i32_1 = arith.constant 0 : i32
    return %c0_i32, %c0_i32_0 : i32, i32
  }
  func.func @transform_6(%arg0: i32, %arg1: i32) -> (i32, i32) {
    %c0_i32 = arith.constant 0 : i32
    %c0_i32_0 = arith.constant 0 : i32
    %c0_i32_1 = arith.constant 0 : i32
    return %c0_i32, %c0_i32_0 : i32, i32
  }
  func.func @transform_7(%arg0: i32, %arg1: i32) -> (i32, i32) {
    %c0_i32 = arith.constant 0 : i32
    %c0_i32_0 = arith.constant 0 : i32
    %c0_i32_1 = arith.constant 0 : i32
    return %c0_i32, %c0_i32_0 : i32, i32
  }
  func.func @transform_8(%arg0: i32, %arg1: i32) -> (i32, i32) {
    %c0_i32 = arith.constant 0 : i32
    %c0_i32_0 = arith.constant 0 : i32
    %c0_i32_1 = arith.constant 0 : i32
    return %c0_i32, %c0_i32_0 : i32, i32
  }
  func.func @transform_9(%arg0: i32, %arg1: i32) -> (i32, i32) {
    %c0_i32 = arith.constant 0 : i32
    %c0_i32_0 = arith.constant 0 : i32
    return %arg0, %c0_i32 : i32, i32
  }
}

</mosaic_0001>

<llo_original>
// kernel: tpu_custom_call.1
$region0: #{tpu_custom_call.1}
  #allocation0 [shape = 'u32[]', space=smem, size = 0x4, offset = 0x4, fixed_abs, tag = 'smem constant byte address 0x4 - core index']
  #allocation1 [shape = 'u32[144,128]{1,0:T(1,128)}', space=vmem, size = 0x12000, scoped, tag = 'internal scratch']
  #allocation2 [shape = 'f32[8,32]{1,0:T(8,128)}', space=vmem, size = 0x1000, scoped, tag = 'scratch operand']
  #allocation3 [shape = 'f32[8,1]{1,0:T(8,128)}', space=vmem, size = 0x1000, scoped, tag = 'scratch operand']
  %s0 = inlined_call_operand.vmem [shape: s32[8,1,8], index: 0, kind: input, shape index: {}]
  %s1 = inlined_call_operand.hbm [shape: f32[8,1,8], index: 1, kind: input, shape index: {}]
  %s2 = inlined_call_operand.vmem [shape: bf16[100,32], index: 2, kind: input, shape index: {}]
  %s3 = inlined_call_operand.vmem [shape: bf16[32,32], index: 3, kind: input, shape index: {}]
  %s4 = inlined_call_operand.vmem [shape: f32[1,32], index: 4, kind: input, shape index: {}]
  %s5 = inlined_call_operand.vmem [shape: bf16[32,48], index: 5, kind: input, shape index: {}]
  %s6 = inlined_call_operand.vmem [shape: f32[1,48], index: 6, kind: input, shape index: {}]
  %s7 = inlined_call_operand.vmem [shape: bf16[48,128], index: 7, kind: input, shape index: {}]
  %s8 = inlined_call_operand.vmem [shape: f32[1,128], index: 8, kind: input, shape index: {}]
  %s9 = inlined_call_operand.hbm [shape: f32[8,128], index: 9, kind: output, shape index: {}]
  %s10 = sld [smem:[#allocation0]]
  $region58: #{tpu_custom_call.1} parent=0
    _
  %s12 = ssub.s32 1, %s10
  %s13 = scalar_select 0, %s12, %s10
  $region1: #{tpu_custom_call.1} parent=0
    #allocation4 [shape = 'u8[4096]{0}', space=vmem, size = 0x1000, scoped, tag = 'input window, operand 1, single buffered']
    #allocation5 [shape = 's32[1]{0}', space=sflag, size = 0x4, scoped, tag = 'scoped memory for tpu_custom_call.1']
    #allocation6 [shape = 's32[1]{0}', space=sflag, size = 0x4, scoped, tag = 'scoped memory for tpu_custom_call.1']
    #allocation7 [shape = 'u8[4096]{0}', space=vmem, size = 0x1000, scoped, tag = 'output window, operand 0, single buffered']
    %14 = vsyncpa [#allocation5], 0
    %15 = vsyncpa [#allocation6], 0
    // Predicated region
    $region2: #{tpu_custom_call.1} parent=1 // pred_check
      _
    $region3: #{tpu_custom_call.1} parent=1 // pred_check_branch
      %17 = sbr.rel (0) target = $region5
    $region4: #{tpu_custom_call.1} parent=1 // pred_region
      _
    $region5: #{tpu_custom_call.1} parent=1 // pred_fallthru
      _
    // Predicated region
    $region6: #{tpu_custom_call.1} parent=1 // pred_check
      _
    $region7: #{tpu_custom_call.1} parent=1 // pred_check_branch
      %19 = sbr.rel (0) target = $region9
    $region8: #{tpu_custom_call.1} parent=1 // pred_region
      %s21 = ssub.s32 128, 128
      %22 = vsyncadd [#allocation5], %s21
      %s23 = sshll.u32 [#allocation4], 4
      %s24 = int_to_ptr.vmem [resolvable:$true] %s23
      %29 = dma.hbm_to_vmem [thread:$0]  %s1, 128, %s24, [#allocation5], 16, 16, 1
    $region9: #{tpu_custom_call.1} parent=1 // pred_fallthru
      _
    // Predicated region
    $region10: #{tpu_custom_call.1} parent=1 // pred_check
      _
    $region11: #{tpu_custom_call.1} parent=1 // pred_check_branch
      %31 = sbr.rel (0) target = $region13
    $region12: #{tpu_custom_call.1} parent=1 // pred_region
      _
    $region13: #{tpu_custom_call.1} parent=1 // pred_fallthru
      _
    // Predicated region
    $region14: #{tpu_custom_call.1} parent=1 // pred_check
      _
    $region15: #{tpu_custom_call.1} parent=1 // pred_check_branch
      %33 = sbr.rel (0) target = $region17
    $region16: #{tpu_custom_call.1} parent=1 // pred_region
      _
    $region17: #{tpu_custom_call.1} parent=1 // pred_fallthru
      _
    // Predicated region
    $region18: #{tpu_custom_call.1} parent=1 // pred_check
      _
    $region19: #{tpu_custom_call.1} parent=1 // pred_check_branch
      %35 = sbr.rel (0) target = $region21
    $region20: #{tpu_custom_call.1} parent=1 // pred_region
      _
    $region21: #{tpu_custom_call.1} parent=1 // pred_fallthru
      _
    // Predicated region
    $region22: #{tpu_custom_call.1} parent=1 // pred_check
      _
    $region23: #{tpu_custom_call.1} parent=1 // pred_check_branch
      %37 = sbr.rel (0) target = $region25
    $region24: #{tpu_custom_call.1} parent=1 // pred_region
      _
    $region25: #{tpu_custom_call.1} parent=1 // pred_fallthru
      _
    // Predicated region
    $region26: #{tpu_custom_call.1} parent=1 // pred_check
      _
    $region27: #{tpu_custom_call.1} parent=1 // pred_check_branch
      %39 = sbr.rel (0) target = $region29
    $region28: #{tpu_custom_call.1} parent=1 // pred_region
      _
    $region29: #{tpu_custom_call.1} parent=1 // pred_fallthru
      _
    // Predicated region
    $region30: #{tpu_custom_call.1} parent=1 // pred_check
      _
    $region31: #{tpu_custom_call.1} parent=1 // pred_check_branch
      %41 = sbr.rel (0) target = $region33
    $region32: #{tpu_custom_call.1} parent=1 // pred_region
      _
    $region33: #{tpu_custom_call.1} parent=1 // pred_fallthru
      _
    // Predicated region
    $region34: #{tpu_custom_call.1} parent=1 // pred_check
      _
    $region35: #{tpu_custom_call.1} parent=1 // pred_check_branch
      %43 = sbr.rel (0) target = $region37
    $region36: #{tpu_custom_call.1} parent=1 // pred_region
      _
    $region37: #{tpu_custom_call.1} parent=1 // pred_fallthru
      _
    // Predicated region
    $region38: #{tpu_custom_call.1} parent=1 // pred_check
      _
    $region39: #{tpu_custom_call.1} parent=1 // pred_check_branch
      %45 = sbr.rel (0) target = $region41
    $region40: #{tpu_custom_call.1} parent=1 // pred_region
      %46 = dma.done [#allocation5], 128
    $region41: #{tpu_custom_call.1} parent=1 // pred_fallthru
      _
    %p48 = scmp.eq.s32.totalorder 0, 0
    // Predicated region
    $region42: #{tpu_custom_call.1} parent=1 // pred_check
      %p49 = pneg %p48
    $region43: #{tpu_custom_call.1} parent=1 // pred_check_branch
      %51 = sbr.rel (%p49) target = $region45
    $region44: #{tpu_custom_call.1} parent=1 // pred_region
      %vm52 = vcmask 261120
      %53 = vst.msk [vmem:[#allocation2] sm:$0xff] %vm52, 0.0
      %vm54 = vcmask 7168
      %55 = vst.msk [vmem:[#allocation3] sm:$0xff] %vm54, 0.0
    $region45: #{tpu_custom_call.1} parent=1 // pred_fallthru
      _
    %v56 = vld [vmem:[%s0] sm:$0x1]
    %v57 = vld [vmem:[%s0 + $0x1] sm:$0x1]
    %v58 = vld [vmem:[%s0 + $0x2] sm:$0x1]
    %v59 = vld [vmem:[%s0 + $0x3] sm:$0x1]
    %v60 = vld [vmem:[%s0 + $0x4] sm:$0x1]
    %v61 = vld [vmem:[%s0 + $0x5] sm:$0x1]
    %v62 = vld [vmem:[%s0 + $0x6] sm:$0x1]
    %v63 = vld [vmem:[%s0 + $0x7] sm:$0x1]
    %v64 = vld [vmem:[#allocation4] sm:$0x1]
    %v65 = vld [vmem:[#allocation4 + $0x1] sm:$0x1]
    %v66 = vld [vmem:[#allocation4 + $0x2] sm:$0x1]
    %v67 = vld [vmem:[#allocation4 + $0x3] sm:$0x1]
    %v68 = vld [vmem:[#allocation4 + $0x4] sm:$0x1]
    %v69 = vld [vmem:[#allocation4 + $0x5] sm:$0x1]
    %v70 = vld [vmem:[#allocation4 + $0x6] sm:$0x1]
    %v71 = vld [vmem:[#allocation4 + $0x7] sm:$0x1]
    %v72 = vlaneseq
    %v73 = vshrl.u32 %v72, 7
    %v74 = vadd.s32 %v73, 8
    %v75 = vadd.s32 %v73, 16
    %v76 = vadd.s32 %v73, 24
    %v77 = vadd.s32 %v73, 32
    %v78 = vadd.s32 %v73, 40
    %v79 = vadd.s32 %v73, 48
    %v80 = vadd.s32 %v73, 56
    %v81 = vadd.s32 %v73, 64
    %v82 = vadd.s32 %v73, 72
    %v83 = vadd.s32 %v73, 80
    %v84 = vadd.s32 %v73, 88
    %v85 = vadd.s32 %v73, 96
    %v86 = vlaneseq
    %v87 = vshrl.u32 %v86, 7
    %v88 = vsub.s32 0, %v87
    %v89 = vrot.slane %v56, %v88
    %v90 = vlaneseq
    %v91 = vshrl.u32 %v90, 7
    %v92 = vsub.s32 0, %v91
    %v93 = vrot.slane %v57, %v92
    %v94 = vlaneseq
    %v95 = vshrl.u32 %v94, 7
    %v96 = vsub.s32 0, %v95
    %v97 = vrot.slane %v58, %v96
    %v98 = vlaneseq
    %v99 = vshrl.u32 %v98, 7
    %v100 = vsub.s32 0, %v99
    %v101 = vrot.slane %v59, %v100
    %v102 = vlaneseq
    %v103 = vshrl.u32 %v102, 7
    %v104 = vsub.s32 0, %v103
    %v105 = vrot.slane %v60, %v104
    %v106 = vlaneseq
    %v107 = vshrl.u32 %v106, 7
    %v108 = vsub.s32 0, %v107
    %v109 = vrot.slane %v61, %v108
    %v110 = vlaneseq
    %v111 = vshrl.u32 %v110, 7
    %v112 = vsub.s32 0, %v111
    %v113 = vrot.slane %v62, %v112
    %v114 = vlaneseq
    %v115 = vshrl.u32 %v114, 7
    %v116 = vsub.s32 0, %v115
    %v117 = vrot.slane %v63, %v116
    %vm118 = vcmp.eq.s32.totalorder %v89, %v73
    %vm119 = vcmp.eq.s32.totalorder %v89, %v74
    %vm120 = vcmp.eq.s32.totalorder %v89, %v75
    %vm121 = vcmp.eq.s32.totalorder %v89, %v76
    %vm122 = vcmp.eq.s32.totalorder %v89, %v77
    %vm123 = vcmp.eq.s32.totalorder %v89, %v78
    %vm124 = vcmp.eq.s32.totalorder %v89, %v79
    %vm125 = vcmp.eq.s32.totalorder %v89, %v80
    %vm126 = vcmp.eq.s32.totalorder %v89, %v81
    %vm127 = vcmp.eq.s32.totalorder %v89, %v82
    %vm128 = vcmp.eq.s32.totalorder %v89, %v83
    %vm129 = vcmp.eq.s32.totalorder %v89, %v84
    %vm130 = vcmp.eq.s32.totalorder %v89, %v85
    %vm131 = vcmp.eq.s32.totalorder %v93, %v73
    %vm132 = vcmp.eq.s32.totalorder %v93, %v74
    %vm133 = vcmp.eq.s32.totalorder %v93, %v75
    %vm134 = vcmp.eq.s32.totalorder %v93, %v76
    %vm135 = vcmp.eq.s32.totalorder %v93, %v77
    %vm136 = vcmp.eq.s32.totalorder %v93, %v78
    %vm137 = vcmp.eq.s32.totalorder %v93, %v79
    %vm138 = vcmp.eq.s32.totalorder %v93, %v80
    %vm139 = vcmp.eq.s32.totalorder %v93, %v81
    %vm140 = vcmp.eq.s32.totalorder %v93, %v82
    %vm141 = vcmp.eq.s32.totalorder %v93, %v83
    %vm142 = vcmp.eq.s32.totalorder %v93, %v84
    %vm143 = vcmp.eq.s32.totalorder %v93, %v85
    %vm144 = vcmp.eq.s32.totalorder %v97, %v73
    %vm145 = vcmp.eq.s32.totalorder %v97, %v74
    %vm146 = vcmp.eq.s32.totalorder %v97, %v75
    %vm147 = vcmp.eq.s32.totalorder %v97, %v76
    %vm148 = vcmp.eq.s32.totalorder %v97, %v77
    %vm149 = vcmp.eq.s32.totalorder %v97, %v78
    %vm150 = vcmp.eq.s32.totalorder %v97, %v79
    %vm151 = vcmp.eq.s32.totalorder %v97, %v80
    %vm152 = vcmp.eq.s32.totalorder %v97, %v81
    %vm153 = vcmp.eq.s32.totalorder %v97, %v82
    %vm154 = vcmp.eq.s32.totalorder %v97, %v83
    %vm155 = vcmp.eq.s32.totalorder %v97, %v84
    %vm156 = vcmp.eq.s32.totalorder %v97, %v85
    %vm157 = vcmp.eq.s32.totalorder %v101, %v73
    %vm158 = vcmp.eq.s32.totalorder %v101, %v74
    %vm159 = vcmp.eq.s32.totalorder %v101, %v75
    %vm160 = vcmp.eq.s32.totalorder %v101, %v76
    %vm161 = vcmp.eq.s32.totalorder %v101, %v77
    %vm162 = vcmp.eq.s32.totalorder %v101, %v78
    %vm163 = vcmp.eq.s32.totalorder %v101, %v79
    %vm164 = vcmp.eq.s32.totalorder %v101, %v80
    %vm165 = vcmp.eq.s32.totalorder %v101, %v81
    %vm166 = vcmp.eq.s32.totalorder %v101, %v82
    %vm167 = vcmp.eq.s32.totalorder %v101, %v83
    %vm168 = vcmp.eq.s32.totalorder %v101, %v84
    %vm169 = vcmp.eq.s32.totalorder %v101, %v85
    %vm170 = vcmp.eq.s32.totalorder %v105, %v73
    %vm171 = vcmp.eq.s32.totalorder %v105, %v74
    %vm172 = vcmp.eq.s32.totalorder %v105, %v75
    %vm173 = vcmp.eq.s32.totalorder %v105, %v76
    %vm174 = vcmp.eq.s32.totalorder %v105, %v77
    %vm175 = vcmp.eq.s32.totalorder %v105, %v78
    %vm176 = vcmp.eq.s32.totalorder %v105, %v79
    %vm177 = vcmp.eq.s32.totalorder %v105, %v80
    %vm178 = vcmp.eq.s32.totalorder %v105, %v81
    %vm179 = vcmp.eq.s32.totalorder %v105, %v82
    %vm180 = vcmp.eq.s32.totalorder %v105, %v83
    %vm181 = vcmp.eq.s32.totalorder %v105, %v84
    %vm182 = vcmp.eq.s32.totalorder %v105, %v85
    %vm183 = vcmp.eq.s32.totalorder %v109, %v73
    %vm184 = vcmp.eq.s32.totalorder %v109, %v74
    %vm185 = vcmp.eq.s32.totalorder %v109, %v75
    %vm186 = vcmp.eq.s32.totalorder %v109, %v76
    %vm187 = vcmp.eq.s32.totalorder %v109, %v77
    %vm188 = vcmp.eq.s32.totalorder %v109, %v78
    %vm189 = vcmp.eq.s32.totalorder %v109, %v79
    %vm190 = vcmp.eq.s32.totalorder %v109, %v80
    %vm191 = vcmp.eq.s32.totalorder %v109, %v81
    %vm192 = vcmp.eq.s32.totalorder %v109, %v82
    %vm193 = vcmp.eq.s32.totalorder %v109, %v83
    %vm194 = vcmp.eq.s32.totalorder %v109, %v84
    %vm195 = vcmp.eq.s32.totalorder %v109, %v85
    %vm196 = vcmp.eq.s32.totalorder %v113, %v73
    %vm197 = vcmp.eq.s32.totalorder %v113, %v74
    %vm198 = vcmp.eq.s32.totalorder %v113, %v75
    %vm199 = vcmp.eq.s32.totalorder %v113, %v76
    %vm200 = vcmp.eq.s32.totalorder %v113, %v77
    %vm201 = vcmp.eq.s32.totalorder %v113, %v78
    %vm202 = vcmp.eq.s32.totalorder %v113, %v79
    %vm203 = vcmp.eq.s32.totalorder %v113, %v80
    %vm204 = vcmp.eq.s32.totalorder %v113, %v81
    %vm205 = vcmp.eq.s32.totalorder %v113, %v82
    %vm206 = vcmp.eq.s32.totalorder %v113, %v83
    %vm207 = vcmp.eq.s32.totalorder %v113, %v84
    %vm208 = vcmp.eq.s32.totalorder %v113, %v85
    %vm209 = vcmp.eq.s32.totalorder %v117, %v73
    %vm210 = vcmp.eq.s32.totalorder %v117, %v74
    %vm211 = vcmp.eq.s32.totalorder %v117, %v75
    %vm212 = vcmp.eq.s32.totalorder %v117, %v76
    %vm213 = vcmp.eq.s32.totalorder %v117, %v77
    %vm214 = vcmp.eq.s32.totalorder %v117, %v78
    %vm215 = vcmp.eq.s32.totalorder %v117, %v79
    %vm216 = vcmp.eq.s32.totalorder %v117, %v80
    %vm217 = vcmp.eq.s32.totalorder %v117, %v81
    %vm218 = vcmp.eq.s32.totalorder %v117, %v82
    %vm219 = vcmp.eq.s32.totalorder %v117, %v83
    %vm220 = vcmp.eq.s32.totalorder %v117, %v84
    %vm221 = vcmp.eq.s32.totalorder %v117, %v85
    %v230 = vlaneseq
    %v231 = vshrl.u32 %v230, 7
    %v232 = vsub.s32 0, %v231
    %v233 = vrot.slane %v64, %v232
    %v234 = vlaneseq
    %v235 = vshrl.u32 %v234, 7
    %v236 = vsub.s32 0, %v235
    %v237 = vrot.slane %v65, %v236
    %v238 = vlaneseq
    %v239 = vshrl.u32 %v238, 7
    %v240 = vsub.s32 0, %v239
    %v241 = vrot.slane %v66, %v240
    %v242 = vlaneseq
    %v243 = vshrl.u32 %v242, 7
    %v244 = vsub.s32 0, %v243
    %v245 = vrot.slane %v67, %v244
    %v246 = vlaneseq
    %v247 = vshrl.u32 %v246, 7
    %v248 = vsub.s32 0, %v247
    %v249 = vrot.slane %v68, %v248
    %v250 = vlaneseq
    %v251 = vshrl.u32 %v250, 7
    %v252 = vsub.s32 0, %v251
    %v253 = vrot.slane %v69, %v252
    %v254 = vlaneseq
    %v255 = vshrl.u32 %v254, 7
    %v256 = vsub.s32 0, %v255
    %v257 = vrot.slane %v70, %v256
    %v258 = vlaneseq
    %v259 = vshrl.u32 %v258, 7
    %v260 = vsub.s32 0, %v259
    %v261 = vrot.slane %v71, %v260
    %v270 = vsel %vm118, %v233, 0.0
    %v271 = vsel %vm119, %v233, 0.0
    %v272 = vsel %vm120, %v233, 0.0
    %v273 = vsel %vm121, %v233, 0.0
    %v274 = vsel %vm122, %v233, 0.0
    %v275 = vsel %vm123, %v233, 0.0
    %v276 = vsel %vm124, %v233, 0.0
    %v277 = vsel %vm125, %v233, 0.0
    %v278 = vsel %vm126, %v233, 0.0
    %v279 = vsel %vm127, %v233, 0.0
    %v280 = vsel %vm128, %v233, 0.0
    %v281 = vsel %vm129, %v233, 0.0
    %v282 = vsel %vm130, %v233, 0.0
    %v283 = vsel %vm131, %v237, 0.0
    %v284 = vsel %vm132, %v237, 0.0
    %v285 = vsel %vm133, %v237, 0.0
    %v286 = vsel %vm134, %v237, 0.0
    %v287 = vsel %vm135, %v237, 0.0
    %v288 = vsel %vm136, %v237, 0.0
    %v289 = vsel %vm137, %v237, 0.0
    %v290 = vsel %vm138, %v237, 0.0
    %v291 = vsel %vm139, %v237, 0.0
    %v292 = vsel %vm140, %v237, 0.0
    %v293 = vsel %vm141, %v237, 0.0
    %v294 = vsel %vm142, %v237, 0.0
    %v295 = vsel %vm143, %v237, 0.0
    %v296 = vsel %vm144, %v241, 0.0
    %v297 = vsel %vm145, %v241, 0.0
    %v298 = vsel %vm146, %v241, 0.0
    %v299 = vsel %vm147, %v241, 0.0
    %v300 = vsel %vm148, %v241, 0.0
    %v301 = vsel %vm149, %v241, 0.0
    %v302 = vsel %vm150, %v241, 0.0
    %v303 = vsel %vm151, %v241, 0.0
    %v304 = vsel %vm152, %v241, 0.0
    %v305 = vsel %vm153, %v241, 0.0
    %v306 = vsel %vm154, %v241, 0.0
    %v307 = vsel %vm155, %v241, 0.0
    %v308 = vsel %vm156, %v241, 0.0
    %v309 = vsel %vm157, %v245, 0.0
    %v310 = vsel %vm158, %v245, 0.0
    %v311 = vsel %vm159, %v245, 0.0
    %v312 = vsel %vm160, %v245, 0.0
    %v313 = vsel %vm161, %v245, 0.0
    %v314 = vsel %vm162, %v245, 0.0
    %v315 = vsel %vm163, %v245, 0.0
    %v316 = vsel %vm164, %v245, 0.0
    %v317 = vsel %vm165, %v245, 0.0
    %v318 = vsel %vm166, %v245, 0.0
    %v319 = vsel %vm167, %v245, 0.0
    %v320 = vsel %vm168, %v245, 0.0
    %v321 = vsel %vm169, %v245, 0.0
    %v322 = vsel %vm170, %v249, 0.0
    %v323 = vsel %vm171, %v249, 0.0
    %v324 = vsel %vm172, %v249, 0.0
    %v325 = vsel %vm173, %v249, 0.0
    %v326 = vsel %vm174, %v249, 0.0
    %v327 = vsel %vm175, %v249, 0.0
    %v328 = vsel %vm176, %v249, 0.0
    %v329 = vsel %vm177, %v249, 0.0
    %v330 = vsel %vm178, %v249, 0.0
    %v331 = vsel %vm179, %v249, 0.0
    %v332 = vsel %vm180, %v249, 0.0
    %v333 = vsel %vm181, %v249, 0.0
    %v334 = vsel %vm182, %v249, 0.0
    %v335 = vsel %vm183, %v253, 0.0
    %v336 = vsel %vm184, %v253, 0.0
    %v337 = vsel %vm185, %v253, 0.0
    %v338 = vsel %vm186, %v253, 0.0
    %v339 = vsel %vm187, %v253, 0.0
    %v340 = vsel %vm188, %v253, 0.0
    %v341 = vsel %vm189, %v253, 0.0
    %v342 = vsel %vm190, %v253, 0.0
    %v343 = vsel %vm191, %v253, 0.0
    %v344 = vsel %vm192, %v253, 0.0
    %v345 = vsel %vm193, %v253, 0.0
    %v346 = vsel %vm194, %v253, 0.0
    %v347 = vsel %vm195, %v253, 0.0
    %v348 = vsel %vm196, %v257, 0.0
    %v349 = vsel %vm197, %v257, 0.0
    %v350 = vsel %vm198, %v257, 0.0
    %v351 = vsel %vm199, %v257, 0.0
    %v352 = vsel %vm200, %v257, 0.0
    %v353 = vsel %vm201, %v257, 0.0
    %v354 = vsel %vm202, %v257, 0.0
    %v355 = vsel %vm203, %v257, 0.0
    %v356 = vsel %vm204, %v257, 0.0
    %v357 = vsel %vm205, %v257, 0.0
    %v358 = vsel %vm206, %v257, 0.0
    %v359 = vsel %vm207, %v257, 0.0
    %v360 = vsel %vm208, %v257, 0.0
    %v361 = vsel %vm209, %v261, 0.0
    %v362 = vsel %vm210, %v261, 0.0
    %v363 = vsel %vm211, %v261, 0.0
    %v364 = vsel %vm212, %v261, 0.0
    %v365 = vsel %vm213, %v261, 0.0
    %v366 = vsel %vm214, %v261, 0.0
    %v367 = vsel %vm215, %v261, 0.0
    %v368 = vsel %vm216, %v261, 0.0
    %v369 = vsel %vm217, %v261, 0.0
    %v370 = vsel %vm218, %v261, 0.0
    %v371 = vsel %vm219, %v261, 0.0
    %v372 = vsel %vm220, %v261, 0.0
    %v373 = vsel %vm221, %v261, 0.0
    %vm374 = vcmask 64512
    %v375 = vsel %vm374, %v270, 0.0
    %376 = vadd.xlane.f32.xlu0 %v375
    %v377 = vpop.xlane.xlu0 %376
    %v378 = vsel %vm374, %v271, 0.0
    %379 = vadd.xlane.f32.xlu0 %v378
    %v380 = vpop.xlane.xlu0 %379
    %v381 = vsel %vm374, %v272, 0.0
    %382 = vadd.xlane.f32.xlu0 %v381
    %v383 = vpop.xlane.xlu0 %382
    %v384 = vsel %vm374, %v273, 0.0
    %385 = vadd.xlane.f32.xlu0 %v384
    %v386 = vpop.xlane.xlu0 %385
    %v387 = vsel %vm374, %v274, 0.0
    %388 = vadd.xlane.f32.xlu0 %v387
    %v389 = vpop.xlane.xlu0 %388
    %v390 = vsel %vm374, %v275, 0.0
    %391 = vadd.xlane.f32.xlu0 %v390
    %v392 = vpop.xlane.xlu0 %391
    %v393 = vsel %vm374, %v276, 0.0
    %394 = vadd.xlane.f32.xlu0 %v393
    %v395 = vpop.xlane.xlu0 %394
    %v396 = vsel %vm374, %v277, 0.0
    %397 = vadd.xlane.f32.xlu0 %v396
    %v398 = vpop.xlane.xlu0 %397
    %v399 = vsel %vm374, %v278, 0.0
    %400 = vadd.xlane.f32.xlu0 %v399
    %v401 = vpop.xlane.xlu0 %400
    %v402 = vsel %vm374, %v279, 0.0
    %403 = vadd.xlane.f32.xlu0 %v402
    %v404 = vpop.xlane.xlu0 %403
    %v405 = vsel %vm374, %v280, 0.0
    %406 = vadd.xlane.f32.xlu0 %v405
    %v407 = vpop.xlane.xlu0 %406
    %v408 = vsel %vm374, %v281, 0.0
    %409 = vadd.xlane.f32.xlu0 %v408
    %v410 = vpop.xlane.xlu0 %409
    %vm411 = vcmask 60416
    %v412 = vsel %vm411, %v282, 0.0
    %413 = vadd.xlane.f32.xlu0 %v412
    %v414 = vpop.xlane.xlu0 %413
    %v415 = vsel %vm374, %v283, 0.0
    %416 = vadd.xlane.f32.xlu0 %v415
    %v417 = vpop.xlane.xlu0 %416
    %v418 = vsel %vm374, %v284, 0.0
    %419 = vadd.xlane.f32.xlu0 %v418
    %v420 = vpop.xlane.xlu0 %419
    %v421 = vsel %vm374, %v285, 0.0
    %422 = vadd.xlane.f32.xlu0 %v421
    %v423 = vpop.xlane.xlu0 %422
    %v424 = vsel %vm374, %v286, 0.0
    %425 = vadd.xlane.f32.xlu0 %v424
    %v426 = vpop.xlane.xlu0 %425
    %v427 = vsel %vm374, %v287, 0.0
    %428 = vadd.xlane.f32.xlu0 %v427
    %v429 = vpop.xlane.xlu0 %428
    %v430 = vsel %vm374, %v288, 0.0
    %431 = vadd.xlane.f32.xlu0 %v430
    %v432 = vpop.xlane.xlu0 %431
    %v433 = vsel %vm374, %v289, 0.0
    %434 = vadd.xlane.f32.xlu0 %v433
    %v435 = vpop.xlane.xlu0 %434
    %v436 = vsel %vm374, %v290, 0.0
    %437 = vadd.xlane.f32.xlu0 %v436
    %v438 = vpop.xlane.xlu0 %437
    %v439 = vsel %vm374, %v291, 0.0
    %440 = vadd.xlane.f32.xlu0 %v439
    %v441 = vpop.xlane.xlu0 %440
    %v442 = vsel %vm374, %v292, 0.0
    %443 = vadd.xlane.f32.xlu0 %v442
    %v444 = vpop.xlane.xlu0 %443
    %v445 = vsel %vm374, %v293, 0.0
    %446 = vadd.xlane.f32.xlu0 %v445
    %v447 = vpop.xlane.xlu0 %446
    %v448 = vsel %vm374, %v294, 0.0
    %449 = vadd.xlane.f32.xlu0 %v448
    %v450 = vpop.xlane.xlu0 %449
    %v451 = vsel %vm411, %v295, 0.0
    %452 = vadd.xlane.f32.xlu0 %v451
    %v453 = vpop.xlane.xlu0 %452
    %v454 = vsel %vm374, %v296, 0.0
    %455 = vadd.xlane.f32.xlu0 %v454
    %v456 = vpop.xlane.xlu0 %455
    %v457 = vsel %vm374, %v297, 0.0
    %458 = vadd.xlane.f32.xlu0 %v457
    %v459 = vpop.xlane.xlu0 %458
    %v460 = vsel %vm374, %v298, 0.0
    %461 = vadd.xlane.f32.xlu0 %v460
    %v462 = vpop.xlane.xlu0 %461
    %v463 = vsel %vm374, %v299, 0.0
    %464 = vadd.xlane.f32.xlu0 %v463
    %v465 = vpop.xlane.xlu0 %464
    %v466 = vsel %vm374, %v300, 0.0
    %467 = vadd.xlane.f32.xlu0 %v466
    %v468 = vpop.xlane.xlu0 %467
    %v469 = vsel %vm374, %v301, 0.0
    %470 = vadd.xlane.f32.xlu0 %v469
    %v471 = vpop.xlane.xlu0 %470
    %v472 = vsel %vm374, %v302, 0.0
    %473 = vadd.xlane.f32.xlu0 %v472
    %v474 = vpop.xlane.xlu0 %473
    %v475 = vsel %vm374, %v303, 0.0
    %476 = vadd.xlane.f32.xlu0 %v475
    %v477 = vpop.xlane.xlu0 %476
    %v478 = vsel %vm374, %v304, 0.0
    %479 = vadd.xlane.f32.xlu0 %v478
    %v480 = vpop.xlane.xlu0 %479
    %v481 = vsel %vm374, %v305, 0.0
    %482 = vadd.xlane.f32.xlu0 %v481
    %v483 = vpop.xlane.xlu0 %482
    %v484 = vsel %vm374, %v306, 0.0
    %485 = vadd.xlane.f32.xlu0 %v484
    %v486 = vpop.xlane.xlu0 %485
    %v487 = vsel %vm374, %v307, 0.0
    %488 = vadd.xlane.f32.xlu0 %v487
    %v489 = vpop.xlane.xlu0 %488
    %v490 = vsel %vm411, %v308, 0.0
    %491 = vadd.xlane.f32.xlu0 %v490
    %v492 = vpop.xlane.xlu0 %491
    %v493 = vsel %vm374, %v309, 0.0
    %494 = vadd.xlane.f32.xlu0 %v493
    %v495 = vpop.xlane.xlu0 %494
    %v496 = vsel %vm374, %v310, 0.0
    %497 = vadd.xlane.f32.xlu0 %v496
    %v498 = vpop.xlane.xlu0 %497
    %v499 = vsel %vm374, %v311, 0.0
    %500 = vadd.xlane.f32.xlu0 %v499
    %v501 = vpop.xlane.xlu0 %500
    %v502 = vsel %vm374, %v312, 0.0
    %503 = vadd.xlane.f32.xlu0 %v502
    %v504 = vpop.xlane.xlu0 %503
    %v505 = vsel %vm374, %v313, 0.0
    %506 = vadd.xlane.f32.xlu0 %v505
    %v507 = vpop.xlane.xlu0 %506
    %v508 = vsel %vm374, %v314, 0.0
    %509 = vadd.xlane.f32.xlu0 %v508
    %v510 = vpop.xlane.xlu0 %509
    %v511 = vsel %vm374, %v315, 0.0
    %512 = vadd.xlane.f32.xlu0 %v511
    %v513 = vpop.xlane.xlu0 %512
    %v514 = vsel %vm374, %v316, 0.0
    %515 = vadd.xlane.f32.xlu0 %v514
    %v516 = vpop.xlane.xlu0 %515
    %v517 = vsel %vm374, %v317, 0.0
    %518 = vadd.xlane.f32.xlu0 %v517
    %v519 = vpop.xlane.xlu0 %518
    %v520 = vsel %vm374, %v318, 0.0
    %521 = vadd.xlane.f32.xlu0 %v520
    %v522 = vpop.xlane.xlu0 %521
    %v523 = vsel %vm374, %v319, 0.0
    %524 = vadd.xlane.f32.xlu0 %v523
    %v525 = vpop.xlane.xlu0 %524
    %v526 = vsel %vm374, %v320, 0.0
    %527 = vadd.xlane.f32.xlu0 %v526
    %v528 = vpop.xlane.xlu0 %527
    %v529 = vsel %vm411, %v321, 0.0
    %530 = vadd.xlane.f32.xlu0 %v529
    %v531 = vpop.xlane.xlu0 %530
    %v532 = vsel %vm374, %v322, 0.0
    %533 = vadd.xlane.f32.xlu0 %v532
    %v534 = vpop.xlane.xlu0 %533
    %v535 = vsel %vm374, %v323, 0.0
    %536 = vadd.xlane.f32.xlu0 %v535
    %v537 = vpop.xlane.xlu0 %536
    %v538 = vsel %vm374, %v324, 0.0
    %539 = vadd.xlane.f32.xlu0 %v538
    %v540 = vpop.xlane.xlu0 %539
    %v541 = vsel %vm374, %v325, 0.0
    %542 = vadd.xlane.f32.xlu0 %v541
    %v543 = vpop.xlane.xlu0 %542
    %v544 = vsel %vm374, %v326, 0.0
    %545 = vadd.xlane.f32.xlu0 %v544
    %v546 = vpop.xlane.xlu0 %545
    %v547 = vsel %vm374, %v327, 0.0
    %548 = vadd.xlane.f32.xlu0 %v547
    %v549 = vpop.xlane.xlu0 %548
    %v550 = vsel %vm374, %v328, 0.0
    %551 = vadd.xlane.f32.xlu0 %v550
    %v552 = vpop.xlane.xlu0 %551
    %v553 = vsel %vm374, %v329, 0.0
    %554 = vadd.xlane.f32.xlu0 %v553
    %v555 = vpop.xlane.xlu0 %554
    %v556 = vsel %vm374, %v330, 0.0
    %557 = vadd.xlane.f32.xlu0 %v556
    %v558 = vpop.xlane.xlu0 %557
    %v559 = vsel %vm374, %v331, 0.0
    %560 = vadd.xlane.f32.xlu0 %v559
    %v561 = vpop.xlane.xlu0 %560
    %v562 = vsel %vm374, %v332, 0.0
    %563 = vadd.xlane.f32.xlu0 %v562
    %v564 = vpop.xlane.xlu0 %563
    %v565 = vsel %vm374, %v333, 0.0
    %566 = vadd.xlane.f32.xlu0 %v565
    %v567 = vpop.xlane.xlu0 %566
    %v568 = vsel %vm411, %v334, 0.0
    %569 = vadd.xlane.f32.xlu0 %v568
    %v570 = vpop.xlane.xlu0 %569
    %v571 = vsel %vm374, %v335, 0.0
    %572 = vadd.xlane.f32.xlu0 %v571
    %v573 = vpop.xlane.xlu0 %572
    %v574 = vsel %vm374, %v336, 0.0
    %575 = vadd.xlane.f32.xlu0 %v574
    %v576 = vpop.xlane.xlu0 %575
    %v577 = vsel %vm374, %v337, 0.0
    %578 = vadd.xlane.f32.xlu0 %v577
    %v579 = vpop.xlane.xlu0 %578
    %v580 = vsel %vm374, %v338, 0.0
    %581 = vadd.xlane.f32.xlu0 %v580
    %v582 = vpop.xlane.xlu0 %581
    %v583 = vsel %vm374, %v339, 0.0
    %584 = vadd.xlane.f32.xlu0 %v583
    %v585 = vpop.xlane.xlu0 %584
    %v586 = vsel %vm374, %v340, 0.0
    %587 = vadd.xlane.f32.xlu0 %v586
    %v588 = vpop.xlane.xlu0 %587
    %v589 = vsel %vm374, %v341, 0.0
    %590 = vadd.xlane.f32.xlu0 %v589
    %v591 = vpop.xlane.xlu0 %590
    %v592 = vsel %vm374, %v342, 0.0
    %593 = vadd.xlane.f32.xlu0 %v592
    %v594 = vpop.xlane.xlu0 %593
    %v595 = vsel %vm374, %v343, 0.0
    %596 = vadd.xlane.f32.xlu0 %v595
    %v597 = vpop.xlane.xlu0 %596
    %v598 = vsel %vm374, %v344, 0.0
    %599 = vadd.xlane.f32.xlu0 %v598
    %v600 = vpop.xlane.xlu0 %599
    %v601 = vsel %vm374, %v345, 0.0
    %602 = vadd.xlane.f32.xlu0 %v601
    %v603 = vpop.xlane.xlu0 %602
    %v604 = vsel %vm374, %v346, 0.0
    %605 = vadd.xlane.f32.xlu0 %v604
    %v606 = vpop.xlane.xlu0 %605
    %v607 = vsel %vm411, %v347, 0.0
    %608 = vadd.xlane.f32.xlu0 %v607
    %v609 = vpop.xlane.xlu0 %608
    %v610 = vsel %vm374, %v348, 0.0
    %611 = vadd.xlane.f32.xlu0 %v610
    %v612 = vpop.xlane.xlu0 %611
    %v613 = vsel %vm374, %v349, 0.0
    %614 = vadd.xlane.f32.xlu0 %v613
    %v615 = vpop.xlane.xlu0 %614
    %v616 = vsel %vm374, %v350, 0.0
    %617 = vadd.xlane.f32.xlu0 %v616
    %v618 = vpop.xlane.xlu0 %617
    %v619 = vsel %vm374, %v351, 0.0
    %620 = vadd.xlane.f32.xlu0 %v619
    %v621 = vpop.xlane.xlu0 %620
    %v622 = vsel %vm374, %v352, 0.0
    %623 = vadd.xlane.f32.xlu0 %v622
    %v624 = vpop.xlane.xlu0 %623
    %v625 = vsel %vm374, %v353, 0.0
    %626 = vadd.xlane.f32.xlu0 %v625
    %v627 = vpop.xlane.xlu0 %626
    %v628 = vsel %vm374, %v354, 0.0
    %629 = vadd.xlane.f32.xlu0 %v628
    %v630 = vpop.xlane.xlu0 %629
    %v631 = vsel %vm374, %v355, 0.0
    %632 = vadd.xlane.f32.xlu0 %v631
    %v633 = vpop.xlane.xlu0 %632
    %v634 = vsel %vm374, %v356, 0.0
    %635 = vadd.xlane.f32.xlu0 %v634
    %v636 = vpop.xlane.xlu0 %635
    %v637 = vsel %vm374, %v357, 0.0
    %638 = vadd.xlane.f32.xlu0 %v637
    %v639 = vpop.xlane.xlu0 %638
    %v640 = vsel %vm374, %v358, 0.0
    %641 = vadd.xlane.f32.xlu0 %v640
    %v642 = vpop.xlane.xlu0 %641
    %v643 = vsel %vm374, %v359, 0.0
    %644 = vadd.xlane.f32.xlu0 %v643
    %v645 = vpop.xlane.xlu0 %644
    %v646 = vsel %vm411, %v360, 0.0
    %647 = vadd.xlane.f32.xlu0 %v646
    %v648 = vpop.xlane.xlu0 %647
    %v649 = vsel %vm374, %v361, 0.0
    %650 = vadd.xlane.f32.xlu0 %v649
    %v651 = vpop.xlane.xlu0 %650
    %v652 = vsel %vm374, %v362, 0.0
    %653 = vadd.xlane.f32.xlu0 %v652
    %v654 = vpop.xlane.xlu0 %653
    %v655 = vsel %vm374, %v363, 0.0
    %656 = vadd.xlane.f32.xlu0 %v655
    %v657 = vpop.xlane.xlu0 %656
    %v658 = vsel %vm374, %v364, 0.0
    %659 = vadd.xlane.f32.xlu0 %v658
    %v660 = vpop.xlane.xlu0 %659
    %v661 = vsel %vm374, %v365, 0.0
    %662 = vadd.xlane.f32.xlu0 %v661
    %v663 = vpop.xlane.xlu0 %662
    %v664 = vsel %vm374, %v366, 0.0
    %665 = vadd.xlane.f32.xlu0 %v664
    %v666 = vpop.xlane.xlu0 %665
    %v667 = vsel %vm374, %v367, 0.0
    %668 = vadd.xlane.f32.xlu0 %v667
    %v669 = vpop.xlane.xlu0 %668
    %v670 = vsel %vm374, %v368, 0.0
    %671 = vadd.xlane.f32.xlu0 %v670
    %v672 = vpop.xlane.xlu0 %671
    %v673 = vsel %vm374, %v369, 0.0
    %674 = vadd.xlane.f32.xlu0 %v673
    %v675 = vpop.xlane.xlu0 %674
    %v676 = vsel %vm374, %v370, 0.0
    %677 = vadd.xlane.f32.xlu0 %v676
    %v678 = vpop.xlane.xlu0 %677
    %v679 = vsel %vm374, %v371, 0.0
    %680 = vadd.xlane.f32.xlu0 %v679
    %v681 = vpop.xlane.xlu0 %680
    %v682 = vsel %vm374, %v372, 0.0
    %683 = vadd.xlane.f32.xlu0 %v682
    %v684 = vpop.xlane.xlu0 %683
    %v685 = vsel %vm411, %v373, 0.0
    %686 = vadd.xlane.f32.xlu0 %v685
    %v687 = vpop.xlane.xlu0 %686
    %v688 = vld [vmem:[#allocation2] sm:$0xff]
    %v689 = vpack.c.bf16 %v380, %v377
    %v690 = vpack.c.bf16 %v386, %v383
    %v691 = vpack.c.bf16 %v392, %v389
    %v692 = vpack.c.bf16 %v398, %v395
    %v693 = vpack.c.bf16 %v404, %v401
    %v694 = vpack.c.bf16 %v410, %v407
    %v695 = vpack.c.bf16 %v414, %v414
    %v696 = vpack.c.bf16 %v420, %v417
    %v697 = vpack.c.bf16 %v426, %v423
    %v698 = vpack.c.bf16 %v432, %v429
    %v699 = vpack.c.bf16 %v438, %v435
    %v700 = vpack.c.bf16 %v444, %v441
    %v701 = vpack.c.bf16 %v450, %v447
    %v702 = vpack.c.bf16 %v453, %v453
    %v703 = vpack.c.bf16 %v459, %v456
    %v704 = vpack.c.bf16 %v465, %v462
    %v705 = vpack.c.bf16 %v471, %v468
    %v706 = vpack.c.bf16 %v477, %v474
    %v707 = vpack.c.bf16 %v483, %v480
    %v708 = vpack.c.bf16 %v489, %v486
    %v709 = vpack.c.bf16 %v492, %v492
    %v710 = vpack.c.bf16 %v498, %v495
    %v711 = vpack.c.bf16 %v504, %v501
    %v712 = vpack.c.bf16 %v510, %v507
    %v713 = vpack.c.bf16 %v516, %v513
    %v714 = vpack.c.bf16 %v522, %v519
    %v715 = vpack.c.bf16 %v528, %v525
    %v716 = vpack.c.bf16 %v531, %v531
    %v717 = vpack.c.bf16 %v537, %v534
    %v718 = vpack.c.bf16 %v543, %v540
    %v719 = vpack.c.bf16 %v549, %v546
    %v720 = vpack.c.bf16 %v555, %v552
    %v721 = vpack.c.bf16 %v561, %v558
    %v722 = vpack.c.bf16 %v567, %v564
    %v723 = vpack.c.bf16 %v570, %v570
    %v724 = vpack.c.bf16 %v576, %v573
    %v725 = vpack.c.bf16 %v582, %v579
    %v726 = vpack.c.bf16 %v588, %v585
    %v727 = vpack.c.bf16 %v594, %v591
    %v728 = vpack.c.bf16 %v600, %v597
    %v729 = vpack.c.bf16 %v606, %v603
    %v730 = vpack.c.bf16 %v609, %v609
    %v731 = vpack.c.bf16 %v615, %v612
    %v732 = vpack.c.bf16 %v621, %v618
    %v733 = vpack.c.bf16 %v627, %v624
    %v734 = vpack.c.bf16 %v633, %v630
    %v735 = vpack.c.bf16 %v639, %v636
    %v736 = vpack.c.bf16 %v645, %v642
    %v737 = vpack.c.bf16 %v648, %v648
    %v738 = vpack.c.bf16 %v654, %v651
    %v739 = vpack.c.bf16 %v660, %v657
    %v740 = vpack.c.bf16 %v666, %v663
    %v741 = vpack.c.bf16 %v672, %v669
    %v742 = vpack.c.bf16 %v678, %v675
    %v743 = vpack.c.bf16 %v684, %v681
    %v744 = vpack.c.bf16 %v687, %v687
    %v745 = vld [vmem:[%s2] sm:$0xf]
    %v746 = vld [vmem:[%s2 + $0x4] sm:$0xf]
    %v747 = vld [vmem:[%s2 + $0x8] sm:$0xf]
    %v748 = vld [vmem:[%s2 + $0xc] sm:$0xf]
    %v749 = vld [vmem:[%s2 + $0x10] sm:$0xf]
    %v750 = vld [vmem:[%s2 + $0x14] sm:$0xf]
    %v751 = vld [vmem:[%s2 + $0x18] sm:$0xf]
    %v752 = vld [vmem:[%s2 + $0x1c] sm:$0xf]
    %v753 = vld [vmem:[%s2 + $0x20] sm:$0xf]
    %v754 = vld [vmem:[%s2 + $0x24] sm:$0xf]
    %v755 = vld [vmem:[%s2 + $0x28] sm:$0xf]
    %v756 = vld [vmem:[%s2 + $0x2c] sm:$0xf]
    %v757 = vld [vmem:[%s2 + $0x30] sm:$0x3]
    %v814 = vunpack.c.l.b16 %v689
    %v815 = vunpack.c.h.b16 %v689
    %v816 = vunpack.c.l.b16 %v690
    %v817 = vunpack.c.h.b16 %v690
    %v818 = vunpack.c.l.b16 %v691
    %v819 = vunpack.c.h.b16 %v691
    %v820 = vunpack.c.l.b16 %v692
    %v821 = vunpack.c.h.b16 %v692
    %v822 = vunpack.c.l.b16 %v693
    %v823 = vunpack.c.h.b16 %v693
    %v824 = vunpack.c.l.b16 %v694
    %v825 = vunpack.c.h.b16 %v694
    %v826 = vunpack.c.l.b16 %v695
    %v827 = vunpack.c.l.b16 %v696
    %v828 = vunpack.c.h.b16 %v696
    %v829 = vunpack.c.l.b16 %v697
    %v830 = vunpack.c.h.b16 %v697
    %v831 = vunpack.c.l.b16 %v698
    %v832 = vunpack.c.h.b16 %v698
    %v833 = vunpack.c.l.b16 %v699
    %v834 = vunpack.c.h.b16 %v699
    %v835 = vunpack.c.l.b16 %v700
    %v836 = vunpack.c.h.b16 %v700
    %v837 = vunpack.c.l.b16 %v701
    %v838 = vunpack.c.h.b16 %v701
    %v839 = vunpack.c.l.b16 %v702
    %v840 = vunpack.c.l.b16 %v703
    %v841 = vunpack.c.h.b16 %v703
    %v842 = vunpack.c.l.b16 %v704
    %v843 = vunpack.c.h.b16 %v704
    %v844 = vunpack.c.l.b16 %v705
    %v845 = vunpack.c.h.b16 %v705
    %v846 = vunpack.c.l.b16 %v706
    %v847 = vunpack.c.h.b16 %v706
    %v848 = vunpack.c.l.b16 %v707
    %v849 = vunpack.c.h.b16 %v707
    %v850 = vunpack.c.l.b16 %v708
    %v851 = vunpack.c.h.b16 %v708
    %v852 = vunpack.c.l.b16 %v709
    %v853 = vunpack.c.l.b16 %v710
    %v854 = vunpack.c.h.b16 %v710
    %v855 = vunpack.c.l.b16 %v711
    %v856 = vunpack.c.h.b16 %v711
    %v857 = vunpack.c.l.b16 %v712
    %v858 = vunpack.c.h.b16 %v712
    %v859 = vunpack.c.l.b16 %v713
    %v860 = vunpack.c.h.b16 %v713
    %v861 = vunpack.c.l.b16 %v714
    %v862 = vunpack.c.h.b16 %v714
    %v863 = vunpack.c.l.b16 %v715
    %v864 = vunpack.c.h.b16 %v715
    %v865 = vunpack.c.l.b16 %v716
    %v866 = vunpack.c.l.b16 %v717
    %v867 = vunpack.c.h.b16 %v717
    %v868 = vunpack.c.l.b16 %v718
    %v869 = vunpack.c.h.b16 %v718
    %v870 = vunpack.c.l.b16 %v719
    %v871 = vunpack.c.h.b16 %v719
    %v872 = vunpack.c.l.b16 %v720
    %v873 = vunpack.c.h.b16 %v720
    %v874 = vunpack.c.l.b16 %v721
    %v875 = vunpack.c.h.b16 %v721
    %v876 = vunpack.c.l.b16 %v722
    %v877 = vunpack.c.h.b16 %v722
    %v878 = vunpack.c.l.b16 %v723
    %v879 = vunpack.c.l.b16 %v724
    %v880 = vunpack.c.h.b16 %v724
    %v881 = vunpack.c.l.b16 %v725
    %v882 = vunpack.c.h.b16 %v725
    %v883 = vunpack.c.l.b16 %v726
    %v884 = vunpack.c.h.b16 %v726
    %v885 = vunpack.c.l.b16 %v727
    %v886 = vunpack.c.h.b16 %v727
    %v887 = vunpack.c.l.b16 %v728
    %v888 = vunpack.c.h.b16 %v728
    %v889 = vunpack.c.l.b16 %v729
    %v890 = vunpack.c.h.b16 %v729
    %v891 = vunpack.c.l.b16 %v730
    %v892 = vunpack.c.l.b16 %v731
    %v893 = vunpack.c.h.b16 %v731
    %v894 = vunpack.c.l.b16 %v732
    %v895 = vunpack.c.h.b16 %v732
    %v896 = vunpack.c.l.b16 %v733
    %v897 = vunpack.c.h.b16 %v733
    %v898 = vunpack.c.l.b16 %v734
    %v899 = vunpack.c.h.b16 %v734
    %v900 = vunpack.c.l.b16 %v735
    %v901 = vunpack.c.h.b16 %v735
    %v902 = vunpack.c.l.b16 %v736
    %v903 = vunpack.c.h.b16 %v736
    %v904 = vunpack.c.l.b16 %v737
    %v905 = vunpack.c.l.b16 %v738
    %v906 = vunpack.c.h.b16 %v738
    %v907 = vunpack.c.l.b16 %v739
    %v908 = vunpack.c.h.b16 %v739
    %v909 = vunpack.c.l.b16 %v740
    %v910 = vunpack.c.h.b16 %v740
    %v911 = vunpack.c.l.b16 %v741
    %v912 = vunpack.c.h.b16 %v741
    %v913 = vunpack.c.l.b16 %v742
    %v914 = vunpack.c.h.b16 %v742
    %v915 = vunpack.c.l.b16 %v743
    %v916 = vunpack.c.h.b16 %v743
    %v917 = vunpack.c.l.b16 %v744
    %v918 = vlaneseq
    %v919 = vand.u32 %v918, 127
    %v920 = vlaneseq
    %v921 = vshrl.u32 %v920, 7
    %v922 = vsub.s32 %v919, %v921
    %v923 = vrot.slane %v814, %v922
    %v924 = vadd.s32 %v919, 4294967288
    %v925 = vlaneseq
    %v926 = vshrl.u32 %v925, 7
    %v927 = vsub.s32 %v924, %v926
    %v928 = vrot.slane %v815, %v927
    %vm929 = vcmask 130112
    %v930 = vsel %vm929, %v928, %v923
    %v931 = vadd.s32 %v919, 4294967280
    %v932 = vlaneseq
    %v933 = vshrl.u32 %v932, 7
    %v934 = vsub.s32 %v931, %v933
    %v935 = vrot.slane %v816, %v934
    %vm936 = vcmask 195712
    %v937 = vsel %vm936, %v935, %v930
    %v938 = vadd.s32 %v919, 4294967272
    %v939 = vlaneseq
    %v940 = vshrl.u32 %v939, 7
    %v941 = vsub.s32 %v938, %v940
    %v942 = vrot.slane %v817, %v941
    %vm943 = vcmask 261312
    %v944 = vsel %vm943, %v942, %v937
    %v945 = vadd.s32 %v919, 4294967264
    %v946 = vlaneseq
    %v947 = vshrl.u32 %v946, 7
    %v948 = vsub.s32 %v945, %v947
    %v949 = vrot.slane %v818, %v948
    %vm950 = vcmask 326912
    %v951 = vsel %vm950, %v949, %v944
    %v952 = vadd.s32 %v919, 4294967256
    %v953 = vlaneseq
    %v954 = vshrl.u32 %v953, 7
    %v955 = vsub.s32 %v952, %v954
    %v956 = vrot.slane %v819, %v955
    %vm957 = vcmask 392512
    %v958 = vsel %vm957, %v956, %v951
    %v959 = vadd.s32 %v919, 4294967248
    %v960 = vlaneseq
    %v961 = vshrl.u32 %v960, 7
    %v962 = vsub.s32 %v959, %v961
    %v963 = vrot.slane %v820, %v962
    %vm964 = vcmask 458112
    %v965 = vsel %vm964, %v963, %v958
    %v966 = vadd.s32 %v919, 4294967240
    %v967 = vlaneseq
    %v968 = vshrl.u32 %v967, 7
    %v969 = vsub.s32 %v966, %v968
    %v970 = vrot.slane %v821, %v969
    %vm971 = vcmask 523712
    %v972 = vsel %vm971, %v970, %v965
    %v973 = vadd.s32 %v919, 4294967232
    %v974 = vlaneseq
    %v975 = vshrl.u32 %v974, 7
    %v976 = vsub.s32 %v973, %v975
    %v977 = vrot.slane %v822, %v976
    %vm978 = vcmask 589312
    %v979 = vsel %vm978, %v977, %v972
    %v980 = vadd.s32 %v919, 4294967224
    %v981 = vlaneseq
    %v982 = vshrl.u32 %v981, 7
    %v983 = vsub.s32 %v980, %v982
    %v984 = vrot.slane %v823, %v983
    %vm985 = vcmask 654912
    %v986 = vsel %vm985, %v984, %v979
    %v987 = vadd.s32 %v919, 4294967216
    %v988 = vlaneseq
    %v989 = vshrl.u32 %v988, 7
    %v990 = vsub.s32 %v987, %v989
    %v991 = vrot.slane %v824, %v990
    %vm992 = vcmask 720512
    %v993 = vsel %vm992, %v991, %v986
    %v994 = vadd.s32 %v919, 4294967208
    %v995 = vlaneseq
    %v996 = vshrl.u32 %v995, 7
    %v997 = vsub.s32 %v994, %v996
    %v998 = vrot.slane %v825, %v997
    %vm999 = vcmask 786112
    %v1000 = vsel %vm999, %v998, %v993
    %v1001 = vadd.s32 %v919, 4294967200
    %v1002 = vlaneseq
    %v1003 = vshrl.u32 %v1002, 7
    %v1004 = vsub.s32 %v1001, %v1003
    %v1005 = vrot.slane %v826, %v1004
    %vm1006 = vcmask 851712
    %v1007 = vsel %vm1006, %v1005, %v1000
    %v1008 = vlaneseq
    %v1009 = vshrl.u32 %v1008, 7
    %v1010 = vsub.s32 %v919, %v1009
    %v1011 = vrot.slane %v827, %v1010
    %v1012 = vlaneseq
    %v1013 = vshrl.u32 %v1012, 7
    %v1014 = vsub.s32 %v924, %v1013
    %v1015 = vrot.slane %v828, %v1014
    %v1016 = vsel %vm929, %v1015, %v1011
    %v1017 = vlaneseq
    %v1018 = vshrl.u32 %v1017, 7
    %v1019 = vsub.s32 %v931, %v1018
    %v1020 = vrot.slane %v829, %v1019
    %v1021 = vsel %vm936, %v1020, %v1016
    %v1022 = vlaneseq
    %v1023 = vshrl.u32 %v1022, 7
    %v1024 = vsub.s32 %v938, %v1023
    %v1025 = vrot.slane %v830, %v1024
    %v1026 = vsel %vm943, %v1025, %v1021
    %v1027 = vlaneseq
    %v1028 = vshrl.u32 %v1027, 7
    %v1029 = vsub.s32 %v945, %v1028
    %v1030 = vrot.slane %v831, %v1029
    %v1031 = vsel %vm950, %v1030, %v1026
    %v1032 = vlaneseq
    %v1033 = vshrl.u32 %v1032, 7
    %v1034 = vsub.s32 %v952, %v1033
    %v1035 = vrot.slane %v832, %v1034
    %v1036 = vsel %vm957, %v1035, %v1031
    %v1037 = vlaneseq
    %v1038 = vshrl.u32 %v1037, 7
    %v1039 = vsub.s32 %v959, %v1038
    %v1040 = vrot.slane %v833, %v1039
    %v1041 = vsel %vm964, %v1040, %v1036
    %v1042 = vlaneseq
    %v1043 = vshrl.u32 %v1042, 7
    %v1044 = vsub.s32 %v966, %v1043
    %v1045 = vrot.slane %v834, %v1044
    %v1046 = vsel %vm971, %v1045, %v1041
    %v1047 = vlaneseq
    %v1048 = vshrl.u32 %v1047, 7
    %v1049 = vsub.s32 %v973, %v1048
    %v1050 = vrot.slane %v835, %v1049
    %v1051 = vsel %vm978, %v1050, %v1046
    %v1052 = vlaneseq
    %v1053 = vshrl.u32 %v1052, 7
    %v1054 = vsub.s32 %v980, %v1053
    %v1055 = vrot.slane %v836, %v1054
    %v1056 = vsel %vm985, %v1055, %v1051
    %v1057 = vlaneseq
    %v1058 = vshrl.u32 %v1057, 7
    %v1059 = vsub.s32 %v987, %v1058
    %v1060 = vrot.slane %v837, %v1059
    %v1061 = vsel %vm992, %v1060, %v1056
    %v1062 = vlaneseq
    %v1063 = vshrl.u32 %v1062, 7
    %v1064 = vsub.s32 %v994, %v1063
    %v1065 = vrot.slane %v838, %v1064
    %v1066 = vsel %vm999, %v1065, %v1061
    %v1067 = vlaneseq
    %v1068 = vshrl.u32 %v1067, 7
    %v1069 = vsub.s32 %v1001, %v1068
    %v1070 = vrot.slane %v839, %v1069
    %v1071 = vsel %vm1006, %v1070, %v1066
    %v1072 = vlaneseq
    %v1073 = vshrl.u32 %v1072, 7
    %v1074 = vsub.s32 %v919, %v1073
    %v1075 = vrot.slane %v840, %v1074
    %v1076 = vlaneseq
    %v1077 = vshrl.u32 %v1076, 7
    %v1078 = vsub.s32 %v924, %v1077
    %v1079 = vrot.slane %v841, %v1078
    %v1080 = vsel %vm929, %v1079, %v1075
    %v1081 = vlaneseq
    %v1082 = vshrl.u32 %v1081, 7
    %v1083 = vsub.s32 %v931, %v1082
    %v1084 = vrot.slane %v842, %v1083
    %v1085 = vsel %vm936, %v1084, %v1080
    %v1086 = vlaneseq
    %v1087 = vshrl.u32 %v1086, 7
    %v1088 = vsub.s32 %v938, %v1087
    %v1089 = vrot.slane %v843, %v1088
    %v1090 = vsel %vm943, %v1089, %v1085
    %v1091 = vlaneseq
    %v1092 = vshrl.u32 %v1091, 7
    %v1093 = vsub.s32 %v945, %v1092
    %v1094 = vrot.slane %v844, %v1093
    %v1095 = vsel %vm950, %v1094, %v1090
    %v1096 = vlaneseq
    %v1097 = vshrl.u32 %v1096, 7
    %v1098 = vsub.s32 %v952, %v1097
    %v1099 = vrot.slane %v845, %v1098
    %v1100 = vsel %vm957, %v1099, %v1095
    %v1101 = vlaneseq
    %v1102 = vshrl.u32 %v1101, 7
    %v1103 = vsub.s32 %v959, %v1102
    %v1104 = vrot.slane %v846, %v1103
    %v1105 = vsel %vm964, %v1104, %v1100
    %v1106 = vlaneseq
    %v1107 = vshrl.u32 %v1106, 7
    %v1108 = vsub.s32 %v966, %v1107
    %v1109 = vrot.slane %v847, %v1108
    %v1110 = vsel %vm971, %v1109, %v1105
    %v1111 = vlaneseq
    %v1112 = vshrl.u32 %v1111, 7
    %v1113 = vsub.s32 %v973, %v1112
    %v1114 = vrot.slane %v848, %v1113
    %v1115 = vsel %vm978, %v1114, %v1110
    %v1116 = vlaneseq
    %v1117 = vshrl.u32 %v1116, 7
    %v1118 = vsub.s32 %v980, %v1117
    %v1119 = vrot.slane %v849, %v1118
    %v1120 = vsel %vm985, %v1119, %v1115
    %v1121 = vlaneseq
    %v1122 = vshrl.u32 %v1121, 7
    %v1123 = vsub.s32 %v987, %v1122
    %v1124 = vrot.slane %v850, %v1123
    %v1125 = vsel %vm992, %v1124, %v1120
    %v1126 = vlaneseq
    %v1127 = vshrl.u32 %v1126, 7
    %v1128 = vsub.s32 %v994, %v1127
    %v1129 = vrot.slane %v851, %v1128
    %v1130 = vsel %vm999, %v1129, %v1125
    %v1131 = vlaneseq
    %v1132 = vshrl.u32 %v1131, 7
    %v1133 = vsub.s32 %v1001, %v1132
    %v1134 = vrot.slane %v852, %v1133
    %v1135 = vsel %vm1006, %v1134, %v1130
    %v1136 = vlaneseq
    %v1137 = vshrl.u32 %v1136, 7
    %v1138 = vsub.s32 %v919, %v1137
    %v1139 = vrot.slane %v853, %v1138
    %v1140 = vlaneseq
    %v1141 = vshrl.u32 %v1140, 7
    %v1142 = vsub.s32 %v924, %v1141
    %v1143 = vrot.slane %v854, %v1142
    %v1144 = vsel %vm929, %v1143, %v1139
    %v1145 = vlaneseq
    %v1146 = vshrl.u32 %v1145, 7
    %v1147 = vsub.s32 %v931, %v1146
    %v1148 = vrot.slane %v855, %v1147
    %v1149 = vsel %vm936, %v1148, %v1144
    %v1150 = vlaneseq
    %v1151 = vshrl.u32 %v1150, 7
    %v1152 = vsub.s32 %v938, %v1151
    %v1153 = vrot.slane %v856, %v1152
    %v1154 = vsel %vm943, %v1153, %v1149
    %v1155 = vlaneseq
    %v1156 = vshrl.u32 %v1155, 7
    %v1157 = vsub.s32 %v945, %v1156
    %v1158 = vrot.slane %v857, %v1157
    %v1159 = vsel %vm950, %v1158, %v1154
    %v1160 = vlaneseq
    %v1161 = vshrl.u32 %v1160, 7
    %v1162 = vsub.s32 %v952, %v1161
    %v1163 = vrot.slane %v858, %v1162
    %v1164 = vsel %vm957, %v1163, %v1159
    %v1165 = vlaneseq
    %v1166 = vshrl.u32 %v1165, 7
    %v1167 = vsub.s32 %v959, %v1166
    %v1168 = vrot.slane %v859, %v1167
    %v1169 = vsel %vm964, %v1168, %v1164
    %v1170 = vlaneseq
    %v1171 = vshrl.u32 %v1170, 7
    %v1172 = vsub.s32 %v966, %v1171
    %v1173 = vrot.slane %v860, %v1172
    %v1174 = vsel %vm971, %v1173, %v1169
    %v1175 = vlaneseq
    %v1176 = vshrl.u32 %v1175, 7
    %v1177 = vsub.s32 %v973, %v1176
    %v1178 = vrot.slane %v861, %v1177
    %v1179 = vsel %vm978, %v1178, %v1174
    %v1180 = vlaneseq
    %v1181 = vshrl.u32 %v1180, 7
    %v1182 = vsub.s32 %v980, %v1181
    %v1183 = vrot.slane %v862, %v1182
    %v1184 = vsel %vm985, %v1183, %v1179
    %v1185 = vlaneseq
    %v1186 = vshrl.u32 %v1185, 7
    %v1187 = vsub.s32 %v987, %v1186
    %v1188 = vrot.slane %v863, %v1187
    %v1189 = vsel %vm992, %v1188, %v1184
    %v1190 = vlaneseq
    %v1191 = vshrl.u32 %v1190, 7
    %v1192 = vsub.s32 %v994, %v1191
    %v1193 = vrot.slane %v864, %v1192
    %v1194 = vsel %vm999, %v1193, %v1189
    %v1195 = vlaneseq
    %v1196 = vshrl.u32 %v1195, 7
    %v1197 = vsub.s32 %v1001, %v1196
    %v1198 = vrot.slane %v865, %v1197
    %v1199 = vsel %vm1006, %v1198, %v1194
    %v1200 = vlaneseq
    %v1201 = vshrl.u32 %v1200, 7
    %v1202 = vsub.s32 %v919, %v1201
    %v1203 = vrot.slane %v866, %v1202
    %v1204 = vlaneseq
    %v1205 = vshrl.u32 %v1204, 7
    %v1206 = vsub.s32 %v924, %v1205
    %v1207 = vrot.slane %v867, %v1206
    %v1208 = vsel %vm929, %v1207, %v1203
    %v1209 = vlaneseq
    %v1210 = vshrl.u32 %v1209, 7
    %v1211 = vsub.s32 %v931, %v1210
    %v1212 = vrot.slane %v868, %v1211
    %v1213 = vsel %vm936, %v1212, %v1208
    %v1214 = vlaneseq
    %v1215 = vshrl.u32 %v1214, 7
    %v1216 = vsub.s32 %v938, %v1215
    %v1217 = vrot.slane %v869, %v1216
    %v1218 = vsel %vm943, %v1217, %v1213
    %v1219 = vlaneseq
    %v1220 = vshrl.u32 %v1219, 7
    %v1221 = vsub.s32 %v945, %v1220
    %v1222 = vrot.slane %v870, %v1221
    %v1223 = vsel %vm950, %v1222, %v1218
    %v1224 = vlaneseq
    %v1225 = vshrl.u32 %v1224, 7
    %v1226 = vsub.s32 %v952, %v1225
    %v1227 = vrot.slane %v871, %v1226
    %v1228 = vsel %vm957, %v1227, %v1223
    %v1229 = vlaneseq
    %v1230 = vshrl.u32 %v1229, 7
    %v1231 = vsub.s32 %v959, %v1230
    %v1232 = vrot.slane %v872, %v1231
    %v1233 = vsel %vm964, %v1232, %v1228
    %v1234 = vlaneseq
    %v1235 = vshrl.u32 %v1234, 7
    %v1236 = vsub.s32 %v966, %v1235
    %v1237 = vrot.slane %v873, %v1236
    %v1238 = vsel %vm971, %v1237, %v1233
    %v1239 = vlaneseq
    %v1240 = vshrl.u32 %v1239, 7
    %v1241 = vsub.s32 %v973, %v1240
    %v1242 = vrot.slane %v874, %v1241
    %v1243 = vsel %vm978, %v1242, %v1238
    %v1244 = vlaneseq
    %v1245 = vshrl.u32 %v1244, 7
    %v1246 = vsub.s32 %v980, %v1245
    %v1247 = vrot.slane %v875, %v1246
    %v1248 = vsel %vm985, %v1247, %v1243
    %v1249 = vlaneseq
    %v1250 = vshrl.u32 %v1249, 7
    %v1251 = vsub.s32 %v987, %v1250
    %v1252 = vrot.slane %v876, %v1251
    %v1253 = vsel %vm992, %v1252, %v1248
    %v1254 = vlaneseq
    %v1255 = vshrl.u32 %v1254, 7
    %v1256 = vsub.s32 %v994, %v1255
    %v1257 = vrot.slane %v877, %v1256
    %v1258 = vsel %vm999, %v1257, %v1253
    %v1259 = vlaneseq
    %v1260 = vshrl.u32 %v1259, 7
    %v1261 = vsub.s32 %v1001, %v1260
    %v1262 = vrot.slane %v878, %v1261
    %v1263 = vsel %vm1006, %v1262, %v1258
    %v1264 = vlaneseq
    %v1265 = vshrl.u32 %v1264, 7
    %v1266 = vsub.s32 %v919, %v1265
    %v1267 = vrot.slane %v879, %v1266
    %v1268 = vlaneseq
    %v1269 = vshrl.u32 %v1268, 7
    %v1270 = vsub.s32 %v924, %v1269
    %v1271 = vrot.slane %v880, %v1270
    %v1272 = vsel %vm929, %v1271, %v1267
    %v1273 = vlaneseq
    %v1274 = vshrl.u32 %v1273, 7
    %v1275 = vsub.s32 %v931, %v1274
    %v1276 = vrot.slane %v881, %v1275
    %v1277 = vsel %vm936, %v1276, %v1272
    %v1278 = vlaneseq
    %v1279 = vshrl.u32 %v1278, 7
    %v1280 = vsub.s32 %v938, %v1279
    %v1281 = vrot.slane %v882, %v1280
    %v1282 = vsel %vm943, %v1281, %v1277
    %v1283 = vlaneseq
    %v1284 = vshrl.u32 %v1283, 7
    %v1285 = vsub.s32 %v945, %v1284
    %v1286 = vrot.slane %v883, %v1285
    %v1287 = vsel %vm950, %v1286, %v1282
    %v1288 = vlaneseq
    %v1289 = vshrl.u32 %v1288, 7
    %v1290 = vsub.s32 %v952, %v1289
    %v1291 = vrot.slane %v884, %v1290
    %v1292 = vsel %vm957, %v1291, %v1287
    %v1293 = vlaneseq
    %v1294 = vshrl.u32 %v1293, 7
    %v1295 = vsub.s32 %v959, %v1294
    %v1296 = vrot.slane %v885, %v1295
    %v1297 = vsel %vm964, %v1296, %v1292
    %v1298 = vlaneseq
    %v1299 = vshrl.u32 %v1298, 7
    %v1300 = vsub.s32 %v966, %v1299
    %v1301 = vrot.slane %v886, %v1300
    %v1302 = vsel %vm971, %v1301, %v1297
    %v1303 = vlaneseq
    %v1304 = vshrl.u32 %v1303, 7
    %v1305 = vsub.s32 %v973, %v1304
    %v1306 = vrot.slane %v887, %v1305
    %v1307 = vsel %vm978, %v1306, %v1302
    %v1308 = vlaneseq
    %v1309 = vshrl.u32 %v1308, 7
    %v1310 = vsub.s32 %v980, %v1309
    %v1311 = vrot.slane %v888, %v1310
    %v1312 = vsel %vm985, %v1311, %v1307
    %v1313 = vlaneseq
    %v1314 = vshrl.u32 %v1313, 7
    %v1315 = vsub.s32 %v987, %v1314
    %v1316 = vrot.slane %v889, %v1315
    %v1317 = vsel %vm992, %v1316, %v1312
    %v1318 = vlaneseq
    %v1319 = vshrl.u32 %v1318, 7
    %v1320 = vsub.s32 %v994, %v1319
    %v1321 = vrot.slane %v890, %v1320
    %v1322 = vsel %vm999, %v1321, %v1317
    %v1323 = vlaneseq
    %v1324 = vshrl.u32 %v1323, 7
    %v1325 = vsub.s32 %v1001, %v1324
    %v1326 = vrot.slane %v891, %v1325
    %v1327 = vsel %vm1006, %v1326, %v1322
    %v1328 = vlaneseq
    %v1329 = vshrl.u32 %v1328, 7
    %v1330 = vsub.s32 %v919, %v1329
    %v1331 = vrot.slane %v892, %v1330
    %v1332 = vlaneseq
    %v1333 = vshrl.u32 %v1332, 7
    %v1334 = vsub.s32 %v924, %v1333
    %v1335 = vrot.slane %v893, %v1334
    %v1336 = vsel %vm929, %v1335, %v1331
    %v1337 = vlaneseq
    %v1338 = vshrl.u32 %v1337, 7
    %v1339 = vsub.s32 %v931, %v1338
    %v1340 = vrot.slane %v894, %v1339
    %v1341 = vsel %vm936, %v1340, %v1336
    %v1342 = vlaneseq
    %v1343 = vshrl.u32 %v1342, 7
    %v1344 = vsub.s32 %v938, %v1343
    %v1345 = vrot.slane %v895, %v1344
    %v1346 = vsel %vm943, %v1345, %v1341
    %v1347 = vlaneseq
    %v1348 = vshrl.u32 %v1347, 7
    %v1349 = vsub.s32 %v945, %v1348
    %v1350 = vrot.slane %v896, %v1349
    %v1351 = vsel %vm950, %v1350, %v1346
    %v1352 = vlaneseq
    %v1353 = vshrl.u32 %v1352, 7
    %v1354 = vsub.s32 %v952, %v1353
    %v1355 = vrot.slane %v897, %v1354
    %v1356 = vsel %vm957, %v1355, %v1351
    %v1357 = vlaneseq
    %v1358 = vshrl.u32 %v1357, 7
    %v1359 = vsub.s32 %v959, %v1358
    %v1360 = vrot.slane %v898, %v1359
    %v1361 = vsel %vm964, %v1360, %v1356
    %v1362 = vlaneseq
    %v1363 = vshrl.u32 %v1362, 7
    %v1364 = vsub.s32 %v966, %v1363
    %v1365 = vrot.slane %v899, %v1364
    %v1366 = vsel %vm971, %v1365, %v1361
    %v1367 = vlaneseq
    %v1368 = vshrl.u32 %v1367, 7
    %v1369 = vsub.s32 %v973, %v1368
    %v1370 = vrot.slane %v900, %v1369
    %v1371 = vsel %vm978, %v1370, %v1366
    %v1372 = vlaneseq
    %v1373 = vshrl.u32 %v1372, 7
    %v1374 = vsub.s32 %v980, %v1373
    %v1375 = vrot.slane %v901, %v1374
    %v1376 = vsel %vm985, %v1375, %v1371
    %v1377 = vlaneseq
    %v1378 = vshrl.u32 %v1377, 7
    %v1379 = vsub.s32 %v987, %v1378
    %v1380 = vrot.slane %v902, %v1379
    %v1381 = vsel %vm992, %v1380, %v1376
    %v1382 = vlaneseq
    %v1383 = vshrl.u32 %v1382, 7
    %v1384 = vsub.s32 %v994, %v1383
    %v1385 = vrot.slane %v903, %v1384
    %v1386 = vsel %vm999, %v1385, %v1381
    %v1387 = vlaneseq
    %v1388 = vshrl.u32 %v1387, 7
    %v1389 = vsub.s32 %v1001, %v1388
    %v1390 = vrot.slane %v904, %v1389
    %v1391 = vsel %vm1006, %v1390, %v1386
    %v1392 = vlaneseq
    %v1393 = vshrl.u32 %v1392, 7
    %v1394 = vsub.s32 %v919, %v1393
    %v1395 = vrot.slane %v905, %v1394
    %v1396 = vlaneseq
    %v1397 = vshrl.u32 %v1396, 7
    %v1398 = vsub.s32 %v924, %v1397
    %v1399 = vrot.slane %v906, %v1398
    %v1400 = vsel %vm929, %v1399, %v1395
    %v1401 = vlaneseq
    %v1402 = vshrl.u32 %v1401, 7
    %v1403 = vsub.s32 %v931, %v1402
    %v1404 = vrot.slane %v907, %v1403
    %v1405 = vsel %vm936, %v1404, %v1400
    %v1406 = vlaneseq
    %v1407 = vshrl.u32 %v1406, 7
    %v1408 = vsub.s32 %v938, %v1407
    %v1409 = vrot.slane %v908, %v1408
    %v1410 = vsel %vm943, %v1409, %v1405
    %v1411 = vlaneseq
    %v1412 = vshrl.u32 %v1411, 7
    %v1413 = vsub.s32 %v945, %v1412
    %v1414 = vrot.slane %v909, %v1413
    %v1415 = vsel %vm950, %v1414, %v1410
    %v1416 = vlaneseq
    %v1417 = vshrl.u32 %v1416, 7
    %v1418 = vsub.s32 %v952, %v1417
    %v1419 = vrot.slane %v910, %v1418
    %v1420 = vsel %vm957, %v1419, %v1415
    %v1421 = vlaneseq
    %v1422 = vshrl.u32 %v1421, 7
    %v1423 = vsub.s32 %v959, %v1422
    %v1424 = vrot.slane %v911, %v1423
    %v1425 = vsel %vm964, %v1424, %v1420
    %v1426 = vlaneseq
    %v1427 = vshrl.u32 %v1426, 7
    %v1428 = vsub.s32 %v966, %v1427
    %v1429 = vrot.slane %v912, %v1428
    %v1430 = vsel %vm971, %v1429, %v1425
    %v1431 = vlaneseq
    %v1432 = vshrl.u32 %v1431, 7
    %v1433 = vsub.s32 %v973, %v1432
    %v1434 = vrot.slane %v913, %v1433
    %v1435 = vsel %vm978, %v1434, %v1430
    %v1436 = vlaneseq
    %v1437 = vshrl.u32 %v1436, 7
    %v1438 = vsub.s32 %v980, %v1437
    %v1439 = vrot.slane %v914, %v1438
    %v1440 = vsel %vm985, %v1439, %v1435
    %v1441 = vlaneseq
    %v1442 = vshrl.u32 %v1441, 7
    %v1443 = vsub.s32 %v987, %v1442
    %v1444 = vrot.slane %v915, %v1443
    %v1445 = vsel %vm992, %v1444, %v1440
    %v1446 = vlaneseq
    %v1447 = vshrl.u32 %v1446, 7
    %v1448 = vsub.s32 %v994, %v1447
    %v1449 = vrot.slane %v916, %v1448
    %v1450 = vsel %vm999, %v1449, %v1445
    %v1451 = vlaneseq
    %v1452 = vshrl.u32 %v1451, 7
    %v1453 = vsub.s32 %v1001, %v1452
    %v1454 = vrot.slane %v917, %v1453
    %v1455 = vsel %vm1006, %v1454, %v1450
    %vm1456 = vcmask 1041409
    %v1457 = vsel %vm1456, %v1071, %v1007
    %vm1458 = vcmask 1042434
    %v1459 = vsel %vm1458, %v1135, %v1457
    %vm1460 = vcmask 1043459
    %v1461 = vsel %vm1460, %v1199, %v1459
    %vm1462 = vcmask 1044484
    %v1463 = vsel %vm1462, %v1263, %v1461
    %vm1464 = vcmask 1045509
    %v1465 = vsel %vm1464, %v1327, %v1463
    %vm1466 = vcmask 1046534
    %v1467 = vsel %vm1466, %v1391, %v1465
    %vm1468 = vcmask 1047559
    %v1469 = vsel %vm1468, %v1455, %v1467
    %v1470 = vpack.c.b16 %v1469, %v1469
    %v1484 = vunpack.c.l.b16 %v745
    %v1485 = vunpack.c.l.b16 %v746
    %v1486 = vunpack.c.l.b16 %v747
    %v1487 = vunpack.c.l.b16 %v748
    %v1488 = vunpack.c.l.b16 %v749
    %v1489 = vunpack.c.l.b16 %v750
    %v1490 = vunpack.c.l.b16 %v751
    %v1491 = vunpack.c.l.b16 %v752
    %v1492 = vunpack.c.l.b16 %v753
    %v1493 = vunpack.c.l.b16 %v754
    %v1494 = vunpack.c.l.b16 %v755
    %v1495 = vunpack.c.l.b16 %v756
    %v1496 = vunpack.c.l.b16 %v757
    %v1497 = vpack.c.b16 %v1485, %v1484
    %v1498 = vpack.c.b16 %v1487, %v1486
    %v1499 = vpack.c.b16 %v1489, %v1488
    %v1500 = vpack.c.b16 %v1491, %v1490
    %v1501 = vpack.c.b16 %v1493, %v1492
    %v1502 = vpack.c.b16 %v1495, %v1494
    %v1503 = vpack.c.b16 %v1496, %v1496
    %vm1510 = vcmask 818176
    %v1512 = vsel %vm1510, %v1470, 0
    %vm1514 = vcmask 1041408
    %v1516 = vsel %vm1514, %v1503, 0
    %1518 = vmatprep.subr.bf16.mxu0 0
    %1519 = vmatpush1.bf16.msra.mxu0 0
    %1520 = vmatprep.subr.bf16.mxu0 0
    %1521 = vmatpush1.bf16.msra.mxu0 %v1516
    %1522 = vmatprep.subr.bf16.mxu0 0
    %1523 = vmatpush1.bf16.msra.mxu0 %v1502
    %1524 = vmatprep.subr.bf16.mxu0 0
    %1525 = vmatpush1.bf16.msra.mxu0 %v1501
    %1526 = vmatprep.subr.bf16.mxu0 0
    %1527 = vmatpush1.bf16.msra.mxu0 %v1500
    %1528 = vmatprep.subr.bf16.mxu0 0
    %1529 = vmatpush1.bf16.msra.mxu0 %v1499
    %1530 = vmatprep.subr.bf16.mxu0 0
    %1531 = vmatpush1.bf16.msra.mxu0 %v1498
    %1532 = vmatprep.subr.bf16.mxu0 0
    %1533 = vmatpush1.bf16.msra.mxu0 %v1497
    %1534 = vmatprep.subr.bf16.mxu0 0
    %1535 = vmatpush2.bf16.msra.mxu0 0
    %1536 = vmatprep.subr.bf16.mxu0 0
    %1537 = vmatpush2.bf16.msra.mxu0 0
    %1538 = vmatprep.subr.bf16.mxu0 0
    %1539 = vmatpush2.bf16.msra.mxu0 0
    %1540 = vmatprep.subr.bf16.mxu0 0
    %1541 = vmatpush2.bf16.msra.mxu0 0
    %1542 = vmatprep.subr.bf16.mxu0 0
    %1543 = vmatpush2.bf16.msra.mxu0 0
    %1544 = vmatprep.subr.bf16.mxu0 0
    %1545 = vmatpush2.bf16.msra.mxu0 0
    %1546 = vmatprep.subr.bf16.mxu0 0
    %1547 = vmatpush2.bf16.msra.mxu0 0
    %1548 = vmatprep.subr.bf16.mxu0 0
    %1549 = vmatpush2.bf16.msra.mxu0 0
    %1550 = vmatprep.mubr.bf16.mxu0 0
    %1551 = vmatmul.mubr.bf16.gmra.mxu0 %v1512
    %v1552 = vpop.f32.mrf.mxu0
    %v1553 = vadd.f32 0.0, %v1552
    %v1554 = vpop.f32.mrf.mxu0
    %v1555 = vpop.f32.mrf.mxu0
    %v1556 = vpop.f32.mrf.mxu0
    %1557 = vdwg.mxu0
    %v1558 = vadd.f32 %v688, %v1553
    %vm1559 = vcmask 261120
    %1560 = vst.msk [vmem:[#allocation2] sm:$0xff] %vm1559, %v1558
    %v1561 = vld [vmem:[#allocation3] sm:$0xff]
    %vm1562 = vcmask 57344
    %v1563 = vsel %vm1562, %v64, 0.0
    %1564 = vadd.xlane.f32.xlu0 %v1563
    %v1565 = vpop.xlane.xlu0 %1564
    %v1566 = vsel %vm1562, %v65, 0.0
    %1567 = vadd.xlane.f32.xlu0 %v1566
    %v1568 = vpop.xlane.xlu0 %1567
    %v1569 = vsel %vm1562, %v66, 0.0
    %1570 = vadd.xlane.f32.xlu0 %v1569
    %v1571 = vpop.xlane.xlu0 %1570
    %v1572 = vsel %vm1562, %v67, 0.0
    %1573 = vadd.xlane.f32.xlu0 %v1572
    %v1574 = vpop.xlane.xlu0 %1573
    %v1575 = vsel %vm1562, %v68, 0.0
    %1576 = vadd.xlane.f32.xlu0 %v1575
    %v1577 = vpop.xlane.xlu0 %1576
    %v1578 = vsel %vm1562, %v69, 0.0
    %1579 = vadd.xlane.f32.xlu0 %v1578
    %v1580 = vpop.xlane.xlu0 %1579
    %v1581 = vsel %vm1562, %v70, 0.0
    %1582 = vadd.xlane.f32.xlu0 %v1581
    %v1583 = vpop.xlane.xlu0 %1582
    %v1584 = vsel %vm1562, %v71, 0.0
    %1585 = vadd.xlane.f32.xlu0 %v1584
    %v1586 = vpop.xlane.xlu0 %1585
    %v1595 = vrot.slane %v1568, 7
    %v1596 = vsel %vm1456, %v1595, %v1565
    %v1597 = vrot.slane %v1571, 6
    %v1598 = vsel %vm1458, %v1597, %v1596
    %v1599 = vrot.slane %v1574, 5
    %v1600 = vsel %vm1460, %v1599, %v1598
    %v1601 = vrot.slane %v1577, 4
    %v1602 = vsel %vm1462, %v1601, %v1600
    %v1603 = vrot.slane %v1580, 3
    %v1604 = vsel %vm1464, %v1603, %v1602
    %v1605 = vrot.slane %v1583, 2
    %v1606 = vsel %vm1466, %v1605, %v1604
    %v1607 = vrot.slane %v1586, 1
    %v1608 = vsel %vm1468, %v1607, %v1606
    %v1610 = vadd.f32 %v1561, %v1608
    %vm1611 = vcmask 7168
    %1612 = vst.msk [vmem:[#allocation3] sm:$0xff] %vm1611, %v1610
    // Predicated region
    $region46: #{tpu_custom_call.1} parent=1 // pred_check
      %p1613 = pneg %p48
    $region47: #{tpu_custom_call.1} parent=1 // pred_check_branch
      %1615 = sbr.rel (%p1613) target = $region49
    $region48: #{tpu_custom_call.1} parent=1 // pred_region
      %v1616 = vld [vmem:[#allocation3] sm:$0xff]
      %v1617 = vmax.f32 %v1616, 1.0
      %v1618 = vld [vmem:[#allocation2] sm:$0xff]
      %1620 = vset.pattern.permute.xlu0 0
      %1621 = vperm.xlu0 %1620, %v1617
      %v1622 = vpop.permute.xlu0 %1621
      %v1624 = vrcp.pop %v1622
      %v1625 = vmul.f32 %v1618, %v1624
      %v1626 = vpack.c.bf16 %v1625, %v1625
      %v1627 = vld [vmem:[%s3] sm:$0xf]
      %v1628 = vld [vmem:[%s3 + $0x4] sm:$0xf]
      %v1629 = vld [vmem:[%s3 + $0x8] sm:$0xf]
      %v1630 = vld [vmem:[%s3 + $0xc] sm:$0xf]
      %v1631 = vld [vmem:[%s4] sm:$0x1]
      %v1633 = vlaneseq
      %v1634 = vshrl.u32 %v1633, 7
      %v1635 = vsub.s32 0, %v1634
      %v1636 = vrot.slane %v1631, %v1635
      %v1642 = vunpack.c.l.b16 %v1627
      %v1643 = vunpack.c.l.b16 %v1628
      %v1644 = vunpack.c.l.b16 %v1629
      %v1645 = vunpack.c.l.b16 %v1630
      %v1646 = vpack.c.b16 %v1643, %v1642
      %v1647 = vpack.c.b16 %v1645, %v1644
      %v1651 = vsel %vm1559, %v1626, 0
      %1653 = vmatprep.subr.bf16.mxu0 0
      %1654 = vmatpush1.bf16.msra.mxu0 0
      %1655 = vmatprep.subr.bf16.mxu0 0
      %1656 = vmatpush1.bf16.msra.mxu0 0
      %1657 = vmatprep.subr.bf16.mxu0 0
      %1658 = vmatpush1.bf16.msra.mxu0 0
      %1659 = vmatprep.subr.bf16.mxu0 0
      %1660 = vmatpush1.bf16.msra.mxu0 0
      %1661 = vmatprep.subr.bf16.mxu0 0
      %1662 = vmatpush1.bf16.msra.mxu0 0
      %1663 = vmatprep.subr.bf16.mxu0 0
      %1664 = vmatpush1.bf16.msra.mxu0 0
      %1665 = vmatprep.subr.bf16.mxu0 0
      %1666 = vmatpush1.bf16.msra.mxu0 %v1647
      %1667 = vmatprep.subr.bf16.mxu0 0
      %1668 = vmatpush1.bf16.msra.mxu0 %v1646
      %1669 = vmatprep.subr.bf16.mxu0 0
      %1670 = vmatpush2.bf16.msra.mxu0 0
      %1671 = vmatprep.subr.bf16.mxu0 0
      %1672 = vmatpush2.bf16.msra.mxu0 0
      %1673 = vmatprep.subr.bf16.mxu0 0
      %1674 = vmatpush2.bf16.msra.mxu0 0
      %1675 = vmatprep.subr.bf16.mxu0 0
      %1676 = vmatpush2.bf16.msra.mxu0 0
      %1677 = vmatprep.subr.bf16.mxu0 0
      %1678 = vmatpush2.bf16.msra.mxu0 0
      %1679 = vmatprep.subr.bf16.mxu0 0
      %1680 = vmatpush2.bf16.msra.mxu0 0
      %1681 = vmatprep.subr.bf16.mxu0 0
      %1682 = vmatpush2.bf16.msra.mxu0 0
      %1683 = vmatprep.subr.bf16.mxu0 0
      %1684 = vmatpush2.bf16.msra.mxu0 0
      %1685 = vmatprep.mubr.bf16.mxu0 0
      %1686 = vmatmul.mubr.bf16.gmra.mxu0 %v1651
      %v1687 = vpop.f32.mrf.mxu0
      %v1688 = vadd.f32 %v1636, %v1687
      %v1689 = vpop.f32.mrf.mxu0
      %v1690 = vpop.f32.mrf.mxu0
      %v1691 = vpop.f32.mrf.mxu0
      %1692 = vdwg.mxu0
      %v1693 = vtanh.pop %v1688
      %v1694 = vpack.c.bf16 %v1693, %v1693
      %v1695 = vld [vmem:[%s5] sm:$0xf]
      %v1696 = vld [vmem:[%s5 + $0x4] sm:$0xf]
      %v1697 = vld [vmem:[%s5 + $0x8] sm:$0xf]
      %v1698 = vld [vmem:[%s5 + $0xc] sm:$0xf]
      %v1699 = vld [vmem:[%s6] sm:$0x1]
      %v1701 = vlaneseq
      %v1702 = vshrl.u32 %v1701, 7
      %v1703 = vsub.s32 0, %v1702
      %v1704 = vrot.slane %v1699, %v1703
      %v1710 = vunpack.c.l.b16 %v1695
      %v1711 = vunpack.c.l.b16 %v1696
      %v1712 = vunpack.c.l.b16 %v1697
      %v1713 = vunpack.c.l.b16 %v1698
      %v1714 = vpack.c.b16 %v1711, %v1710
      %v1715 = vpack.c.b16 %v1713, %v1712
      %v1719 = vsel %vm1559, %v1694, 0
      %1721 = vmatprep.subr.bf16.mxu0 0
      %1722 = vmatpush1.bf16.msra.mxu0 0
      %1723 = vmatprep.subr.bf16.mxu0 0
      %1724 = vmatpush1.bf16.msra.mxu0 0
      %1725 = vmatprep.subr.bf16.mxu0 0
      %1726 = vmatpush1.bf16.msra.mxu0 0
      %1727 = vmatprep.subr.bf16.mxu0 0
      %1728 = vmatpush1.bf16.msra.mxu0 0
      %1729 = vmatprep.subr.bf16.mxu0 0
      %1730 = vmatpush1.bf16.msra.mxu0 0
      %1731 = vmatprep.subr.bf16.mxu0 0
      %1732 = vmatpush1.bf16.msra.mxu0 0
      %1733 = vmatprep.subr.bf16.mxu0 0
      %1734 = vmatpush1.bf16.msra.mxu0 %v1715
      %1735 = vmatprep.subr.bf16.mxu0 0
      %1736 = vmatpush1.bf16.msra.mxu0 %v1714
      %1737 = vmatprep.subr.bf16.mxu0 0
      %1738 = vmatpush2.bf16.msra.mxu0 0
      %1739 = vmatprep.subr.bf16.mxu0 0
      %1740 = vmatpush2.bf16.msra.mxu0 0
      %1741 = vmatprep.subr.bf16.mxu0 0
      %1742 = vmatpush2.bf16.msra.mxu0 0
      %1743 = vmatprep.subr.bf16.mxu0 0
      %1744 = vmatpush2.bf16.msra.mxu0 0
      %1745 = vmatprep.subr.bf16.mxu0 0
      %1746 = vmatpush2.bf16.msra.mxu0 0
      %1747 = vmatprep.subr.bf16.mxu0 0
      %1748 = vmatpush2.bf16.msra.mxu0 0
      %1749 = vmatprep.subr.bf16.mxu0 0
      %1750 = vmatpush2.bf16.msra.mxu0 0
      %1751 = vmatprep.subr.bf16.mxu0 0
      %1752 = vmatpush2.bf16.msra.mxu0 0
      %1753 = vmatprep.mubr.bf16.mxu0 0
      %1754 = vmatmul.mubr.bf16.gmra.mxu0 %v1719
      %v1755 = vpop.f32.mrf.mxu0
      %v1756 = vadd.f32 %v1704, %v1755
      %v1757 = vpop.f32.mrf.mxu0
      %v1758 = vpop.f32.mrf.mxu0
      %v1759 = vpop.f32.mrf.mxu0
      %1760 = vdwg.mxu0
      %v1761 = vmax.f32 %v1756, 0.0
      %v1762 = vpack.c.bf16 %v1761, %v1761
      %v1763 = vld [vmem:[%s7] sm:$0xf]
      %v1764 = vld [vmem:[%s7 + $0x4] sm:$0xf]
      %v1765 = vld [vmem:[%s7 + $0x8] sm:$0xf]
      %v1766 = vld [vmem:[%s7 + $0xc] sm:$0xf]
      %v1767 = vld [vmem:[%s7 + $0x10] sm:$0xf]
      %v1768 = vld [vmem:[%s7 + $0x14] sm:$0xf]
      %v1769 = vld [vmem:[%s8] sm:$0x1]
      %v1771 = vlaneseq
      %v1772 = vshrl.u32 %v1771, 7
      %v1773 = vsub.s32 0, %v1772
      %v1774 = vrot.slane %v1769, %v1773
      %v1782 = vunpack.c.l.b16 %v1763
      %v1783 = vunpack.c.l.b16 %v1764
      %v1784 = vunpack.c.l.b16 %v1765
      %v1785 = vunpack.c.l.b16 %v1766
      %v1786 = vunpack.c.l.b16 %v1767
      %v1787 = vunpack.c.l.b16 %v1768
      %v1788 = vpack.c.b16 %v1783, %v1782
      %v1789 = vpack.c.b16 %v1785, %v1784
      %v1790 = vpack.c.b16 %v1787, %v1786
      %vm1794 = vcmask 392192
      %v1796 = vsel %vm1794, %v1762, 0
      %1798 = vmatprep.subr.bf16.mxu0 0
      %1799 = vmatpush1.bf16.msra.mxu0 0
      %1800 = vmatprep.subr.bf16.mxu0 0
      %1801 = vmatpush1.bf16.msra.mxu0 0
      %1802 = vmatprep.subr.bf16.mxu0 0
      %1803 = vmatpush1.bf16.msra.mxu0 0
      %1804 = vmatprep.subr.bf16.mxu0 0
      %1805 = vmatpush1.bf16.msra.mxu0 0
      %1806 = vmatprep.subr.bf16.mxu0 0
      %1807 = vmatpush1.bf16.msra.mxu0 0
      %1808 = vmatprep.subr.bf16.mxu0 0
      %1809 = vmatpush1.bf16.msra.mxu0 %v1790
      %1810 = vmatprep.subr.bf16.mxu0 0
      %1811 = vmatpush1.bf16.msra.mxu0 %v1789
      %1812 = vmatprep.subr.bf16.mxu0 0
      %1813 = vmatpush1.bf16.msra.mxu0 %v1788
      %1814 = vmatprep.subr.bf16.mxu0 0
      %1815 = vmatpush2.bf16.msra.mxu0 0
      %1816 = vmatprep.subr.bf16.mxu0 0
      %1817 = vmatpush2.bf16.msra.mxu0 0
      %1818 = vmatprep.subr.bf16.mxu0 0
      %1819 = vmatpush2.bf16.msra.mxu0 0
      %1820 = vmatprep.subr.bf16.mxu0 0
      %1821 = vmatpush2.bf16.msra.mxu0 0
      %1822 = vmatprep.subr.bf16.mxu0 0
      %1823 = vmatpush2.bf16.msra.mxu0 0
      %1824 = vmatprep.subr.bf16.mxu0 0
      %1825 = vmatpush2.bf16.msra.mxu0 0
      %1826 = vmatprep.subr.bf16.mxu0 0
      %1827 = vmatpush2.bf16.msra.mxu0 0
      %1828 = vmatprep.subr.bf16.mxu0 0
      %1829 = vmatpush2.bf16.msra.mxu0 0
      %1830 = vmatprep.mubr.bf16.mxu0 0
      %1831 = vmatmul.mubr.bf16.gmra.mxu0 %v1796
      %v1832 = vpop.f32.mrf.mxu0
      %v1833 = vadd.f32 %v1774, %v1832
      %v1834 = vpop.f32.mrf.mxu0
      %v1835 = vpop.f32.mrf.mxu0
      %v1836 = vpop.f32.mrf.mxu0
      %1837 = vdwg.mxu0
      %vm1838 = vcmp.eq.s32.totalorder %v919, 10
      %v1839 = vxor.u32 %v1833, 2147483648
      %v1840 = vmul.f32 %v1839, 1.442695
      %v1841 = vpow.pop %v1840
      %v1842 = vadd.f32 %v1841, 1.0
      %v1843 = vrcp.pop %v1842
      %v1844 = vmul.f32 1.0, %v1843
      %v1845 = vsel %vm1838, %v1844, %v1833
      %1846 = vst [vmem:[#allocation7] sm:$0xff] %v1845
    $region49: #{tpu_custom_call.1} parent=1 // pred_fallthru
      _
    // Predicated region
    $region50: #{tpu_custom_call.1} parent=1 // pred_check
      _
    $region51: #{tpu_custom_call.1} parent=1 // pred_check_branch
      %1848 = sbr.rel (0) target = $region53
    $region52: #{tpu_custom_call.1} parent=1 // pred_region
      %s1850 = ssub.s32 128, 128
      %1851 = vsyncadd [#allocation6], %s1850
      %s1853 = sshll.u32 [#allocation7], 4
      %s1854 = int_to_ptr.vmem [resolvable:$true] %s1853
      %1856 = dma.vmem_to_hbm [thread:$0]  %s1854, 128, %s9, [#allocation6]
    $region53: #{tpu_custom_call.1} parent=1 // pred_fallthru
      _
    // Predicated region
    $region54: #{tpu_custom_call.1} parent=1 // pred_check
      _
    $region55: #{tpu_custom_call.1} parent=1 // pred_check_branch
      %1858 = sbr.rel (0) target = $region57
    $region56: #{tpu_custom_call.1} parent=1 // pred_region
      %1859 = dma.done [#allocation6], 128
    $region57: #{tpu_custom_call.1} parent=1 // pred_fallthru
      _
    %1860 = vsyncpa [#allocation5], 1
    %1861 = vsyncpa [#allocation6], 1

</llo_original>
